<compile_context>
chip_gen: v7x
topology: tpu7x:2x2x1
jax: 0.10.0
libtpu: 0.0.40
codegen_flags: <defaults>
</compile_context>

<pallas_src>
import jax
import jax.numpy as jnp
import numpy as np
from jax import lax
from jax.experimental import pallas as pl
from jax.experimental.pallas import tpu as pltpu

CHANNELS = 4
KSIZE = 3
STRIDE = 2
NUM_LAYERS = 3
DIL_GROWTH = 2
NUM_CONVS = NUM_LAYERS + 1                   # upsample + 3 dilated layers
NSH = 2 * CHANNELS - 1                       # relative channel shifts d in [-3, 3]
WCOLS_PER_CONV = KSIZE * NSH                 # 21 weight columns per conv
NUM_WCOLS = NUM_CONVS * WCOLS_PER_CONV       # 84


def _dilations():
    d = DIL_GROWTH ** (NUM_LAYERS - 1)
    out = []
    for _ in range(NUM_LAYERS):
        out.append(d)
        d //= DIL_GROWTH
    return tuple(out)


DILATIONS = _dilations()  # (4, 2, 1)


# ----------------------------- Pallas kernel ------------------------------- #

def _block_kernel(x_ref, w_ref, b_ref, out_ref):
    R, L_in = x_ref.shape
    L_out = out_ref.shape[-1]

    # Hoisted: whole weight/bias tables loaded once per grid step (tiny).
    wtab = w_ref[...]                              # (R, NUM_WCOLS)
    btab = b_ref[...]                              # (R, NUM_CONVS)
    x = x_ref[...].astype(jnp.float32)             # (R, L_in) sublane-packed slab

    # -------- batch-independent constants, built once per step ---------------
    lane = lax.broadcasted_iota(jnp.int32, (R, L_out), 1)
    even_lane = jnp.bitwise_and(lane, 1) == 0

    # 0/1 "repeat-by-2" matrix: spread[t, n] = 1 iff n // 2 == t.
    row = lax.broadcasted_iota(jnp.int32, (L_in, L_out), 0)
    col = lax.broadcasted_iota(jnp.int32, (L_in, L_out), 1)
    two_row = row + row
    spread = ((col == two_row) | (col == two_row + 1)).astype(jnp.float32)

    mask_cache = {}

    def lane_mask(off):
        if off not in mask_cache:
            mask_cache[off] = (lane + off >= 0) & (lane + off < L_out)
        return mask_cache[off]

    def lshift(z, off):
        # tap[:, t] = z[:, t + off], zero outside [0, L_out); lane roll on the XLU.
        if off == 0:
            return z
        rolled = pltpu.roll(z, (-off) % L_out, axis=1)
        return jnp.where(lane_mask(off), rolled, 0.0)

    def sroll(z, d):
        # rolled[r, :] = z[(r + d) mod R, :]; sublane roll on the XLU.  Wrap-around
        # rows (across batch groups / slab edges) are always multiplied by a zero
        # weight column, so no mask is needed.
        if d == 0:
            return z
        return pltpu.roll(z, (-d) % R, axis=0)

    def channel_mix(z, conv, tap):
        # out[b*C+oc, :] = sum_ic W[oc, ic, tap] * z[b*C+ic, :] for every batch
        # group at once, via 7 sublane shifts + per-row weight columns.
        base = (conv * KSIZE + tap) * NSH
        acc = None
        for di in range(NSH):
            term = wtab[:, base + di:base + di + 1] * sroll(z, di - (CHANNELS - 1))
            acc = term if acc is None else acc + term
        return acc

    def conv3(y, conv, dil):
        # 'same' K=3 dilated conv on the whole (R, L_out) slab.
        acc = None
        for j in range(KSIZE):
            t = channel_mix(lshift(y, (j - 1) * dil), conv, j)
            acc = t if acc is None else acc + t
        return acc + btab[:, conv:conv + 1]

    # ---- ConvTranspose1d (stride 2) in polyphase form ------------------------
    # xd[:, n] = x[:, n // 2]; single batched exact 0/1 scatter per grid step.
    xd = jnp.dot(x, spread, preferred_element_type=jnp.float32,
                 precision=lax.Precision.HIGHEST)              # (R, L_out)
    xd2 = lshift(xd, 2)                                        # xd[:, n + 2]
    #   even output 2t   = Wf[1] @ x[t]
    #   odd  output 2t+1 = Wf[0] @ x[t] + Wf[2] @ x[t+1]
    y_even = channel_mix(xd, 0, 1)
    y_odd = channel_mix(xd, 0, 0) + channel_mix(xd2, 0, 2)
    y = jnp.where(even_lane, y_even, y_odd) + btab[:, 0:1]

    orig = y
    for m_i, d in enumerate(DILATIONS):
        y = conv3(y, m_i + 1, d)
        # SiLU = y * sigmoid(y); exp + reciprocal both run on the EUP slot.
        y = y * pl.reciprocal(1.0 + jnp.exp(-y), approx=False)

    out_ref[...] = (y + orig).astype(out_ref.dtype)            # one unmasked store


# ------------------------------- parameters -------------------------------- #

def weight_norm(v, g):
    # nn.utils.parametrizations.weight_norm with dim=0: norm over dims (1, 2).
    norm = jnp.sqrt(jnp.sum(v * v, axis=(1, 2), keepdims=True))
    return g[:, None, None] * v / norm


def _norm_weights(p):
    # ConvTranspose1d weight: (C_in, C_out, K). Equivalent regular-conv kernel
    # (on the zero-stuffed input): flip taps and swap in/out -> (O, I, K).
    wt = weight_norm(p["up_v"], p["up_g"])
    w_up = jnp.transpose(wt[:, :, ::-1], (1, 0, 2))
    ws = [weight_norm(p[f"l{i}_v"], p[f"l{i}_g"]) for i in range(NUM_LAYERS)]
    bs = [p[f"l{i}_b"] for i in range(NUM_LAYERS)]
    return w_up, p["up_b"], ws, bs


def _pack_tables(p, bn):
    """Pack per-row weight columns for the 7-shift decomposition.

    Column (conv, tap, d) holds, at row r = b*C + oc,
      W_conv[oc, oc + d, tap]  if 0 <= oc + d < C else 0
    tiled over the bn batch groups of one block.  Shapes: (R, 84) and (R, 4).
    """
    w_up, b_up, ws, bs = _norm_weights(p)
    convs = [w_up] + ws
    biases = [b_up] + bs
    oc = jnp.arange(CHANNELS)
    cols = []
    for w in convs:                                 # (O, I, K)
        for j in range(KSIZE):
            m = w[:, :, j]                          # (O, I)
            for d in range(-(CHANNELS - 1), CHANNELS):
                ic = oc + d
                valid = (ic >= 0) & (ic < CHANNELS)
                v = jnp.where(valid, m[oc, jnp.clip(ic, 0, CHANNELS - 1)], 0.0)
                cols.append(v)
    wtab_c = jnp.stack(cols, axis=1)                # (C, 84)
    btab_c = jnp.stack(biases, axis=1)              # (C, 4)
    wtab = jnp.tile(wtab_c, (bn, 1)).astype(jnp.float32)   # (R, 84)
    btab = jnp.tile(btab_c, (bn, 1)).astype(jnp.float32)   # (R, 4)
    return wtab, btab


def _pick_bn(N, L_out):
    """Batch-block size (rows per block = bn*CHANNELS).

    Keep rows a multiple of 8 (full sublane vregs, unmasked stores), keep the
    activation slab small enough to stay in registers, leave >=2 grid steps so
    v7x's two TensorCores both get work, prefer >=4 steps at large N, then take
    the largest bn to amortize the ~0.35us per-grid-step overhead.
    """
    best, best_key = 1, None
    for bn in range(1, N + 1):
        if N % bn:
            continue
        rows = bn * CHANNELS
        if rows % 8 and bn != N:
            continue
        steps = N // bn
        slab_bytes = rows * L_out * 4
        key = (slab_bytes <= 16 * 4096, steps >= 2, steps >= 4, bn)
        if best_key is None or key > best_key:
            best, best_key = bn, key
    return best


# ------------------------------- entry point -------------------------------- #

def transposed_conv_block(x, p):
    N, C, L_in = x.shape
    assert C == CHANNELS
    L_out = L_in * STRIDE

    bn = _pick_bn(N, L_out)
    R = bn * CHANNELS
    wtab, btab = _pack_tables(p, bn)

    # Free, contiguous reshape: sublane-pack (batch, channel) into one row axis.
    x2 = x.reshape(N * CHANNELS, L_in)

    out2 = pl.pallas_call(
        _block_kernel,
        out_shape=jax.ShapeDtypeStruct((N * CHANNELS, L_out), x.dtype),
        grid=(N // bn,),
        in_specs=[
            pl.BlockSpec((R, L_in), lambda g: (g, 0)),
            pl.BlockSpec((R, NUM_WCOLS), lambda g: (0, 0)),
            pl.BlockSpec((R, NUM_CONVS), lambda g: (0, 0)),
        ],
        out_specs=pl.BlockSpec((R, L_out), lambda g: (g, 0)),
        compiler_params=pltpu.CompilerParams(
            dimension_semantics=("parallel",)),
    )(x2, wtab, btab)

    return out2.reshape(N, CHANNELS, L_out)


# --------------------------- pure-JAX reference ----------------------------- #

def reference(x, p):
    w_up, b_up, ws, bs = _norm_weights(p)
    dn = ("NCH", "OIH", "NCH")
    pad = KSIZE // 2
    y = lax.conv_general_dilated(
        x, w_up, window_strides=(1,),
        padding=[(KSIZE - 1 - pad, KSIZE - 1 - pad + STRIDE - 1)],
        lhs_dilation=(STRIDE,), rhs_dilation=(1,),
        dimension_numbers=dn, precision=lax.Precision.HIGHEST)
    y = y + b_up[None, :, None]
    orig = y
    for (w, b), d in zip(zip(ws, bs), DILATIONS):
        y = lax.conv_general_dilated(
            y, w, window_strides=(1,), padding=[(d, d)],
            rhs_dilation=(d,), dimension_numbers=dn,
            precision=lax.Precision.HIGHEST)
        y = y + b[None, :, None]
        y = y * jax.nn.sigmoid(y)
    return y + orig


if __name__ == "__main__":
    key = jax.random.PRNGKey(0)
    keys = iter(jax.random.split(key, 16))

    # N=4 -> bn=2 -> grid=(2,): full (8, 128) f32 vregs AND 2 steps for v7x's 2 TCs.
    N, L_in = 4, 64  # output length = L_in * STRIDE = 128
    x = jax.random.normal(next(keys), (N, CHANNELS, L_in), jnp.float32)

    p = {}
    p["up_v"] = 0.3 * jax.random.normal(next(keys), (CHANNELS, CHANNELS, KSIZE), jnp.float32)
    p["up_g"] = 1.0 + 0.1 * jax.random.normal(next(keys), (CHANNELS,), jnp.float32)
    p["up_b"] = 0.1 * jax.random.normal(next(keys), (CHANNELS,), jnp.float32)
    for i in range(NUM_LAYERS):
        p[f"l{i}_v"] = 0.3 * jax.random.normal(next(keys), (CHANNELS, CHANNELS, KSIZE), jnp.float32)
        p[f"l{i}_g"] = 1.0 + 0.1 * jax.random.normal(next(keys), (CHANNELS,), jnp.float32)
        p[f"l{i}_b"] = 0.1 * jax.random.normal(next(keys), (CHANNELS,), jnp.float32)

    out = jax.jit(transposed_conv_block)(x, p)
    out = jax.block_until_ready(out)

    ref = reference(x, p)
    np.testing.assert_allclose(np.asarray(out), np.asarray(ref), rtol=5e-4, atol=5e-4)
    print("KERNEL_OK")
</pallas_src>

<mosaic_0001>
module attributes {stable_mosaic.version = 11 : i64} {
  func.func @_block_kernel(%arg0: i32, %arg1: memref<8x64xf32, #tpu.memory_space<vmem>>, %arg2: memref<8x84xf32, #tpu.memory_space<vmem>>, %arg3: memref<8x4xf32, #tpu.memory_space<vmem>>, %arg4: memref<8x128xf32, #tpu.memory_space<vmem>>) attributes {dimension_semantics = [#tpu.dimension_semantics<parallel>], iteration_bounds = array<i64: 2>, scalar_prefetch = 0 : i64, scratch_operands = 0 : i64, tpu.core_type = #tpu.core_type<tc>, window_params = [{transform_indices = @transform_0, window_bounds = array<i64: 8, 64>}, {pipeline_mode = #tpu.pipeline_mode<synchronous>, transform_indices = @transform_1, window_bounds = array<i64: 8, 84>}, {pipeline_mode = #tpu.pipeline_mode<synchronous>, transform_indices = @transform_2, window_bounds = array<i64: 8, 4>}, {transform_indices = @transform_3, window_bounds = array<i64: 8, 128>}]} {
    %c0 = arith.constant 0 : index
    %c0_0 = arith.constant 0 : index
    %0 = vector.load %arg2[%c0, %c0_0] : memref<8x84xf32, #tpu.memory_space<vmem>>, vector<8x84xf32>
    %c0_1 = arith.constant 0 : index
    %c0_2 = arith.constant 0 : index
    %1 = vector.load %arg3[%c0_1, %c0_2] : memref<8x4xf32, #tpu.memory_space<vmem>>, vector<8x4xf32>
    %c0_3 = arith.constant 0 : index
    %c0_4 = arith.constant 0 : index
    %2 = vector.load %arg1[%c0_3, %c0_4] : memref<8x64xf32, #tpu.memory_space<vmem>>, vector<8x64xf32>
    %3 = tpu.iota {dimensions = array<i32: 1>} : vector<8x128xi32>
    %c1_i32 = arith.constant 1 : i32
    %4 = vector.broadcast %c1_i32 : i32 to vector<8x128xi32>
    %5 = arith.andi %3, %4 : vector<8x128xi32>
    %c0_i32 = arith.constant 0 : i32
    %6 = vector.broadcast %c0_i32 : i32 to vector<8x128xi32>
    %7 = arith.cmpi eq, %5, %6 : vector<8x128xi32>
    %8 = tpu.iota {dimensions = array<i32: 0>} : vector<64x128xi32>
    %9 = tpu.iota {dimensions = array<i32: 1>} : vector<64x128xi32>
    %10 = arith.addi %8, %8 : vector<64x128xi32>
    %11 = arith.cmpi eq, %9, %10 : vector<64x128xi32>
    %c1_i32_5 = arith.constant 1 : i32
    %12 = vector.broadcast %c1_i32_5 : i32 to vector<64x128xi32>
    %13 = arith.addi %10, %12 : vector<64x128xi32>
    %14 = arith.cmpi eq, %9, %13 : vector<64x128xi32>
    %15 = arith.ori %11, %14 : vector<64x128xi1>
    %16 = arith.extui %15 : vector<64x128xi1> to vector<64x128xi32>
    %17 = arith.sitofp %16 : vector<64x128xi32> to vector<64x128xf32>
    %cst = arith.constant dense<0.000000e+00> : vector<8x128xf32>
    %18 = tpu.matmul %2, %17, %cst {dimension_numbers = #tpu.dot_dimension_numbers<[1], [0], [0], [1], [0, 0, 1, 1], [], []>, precision = #tpu.contract_precision<fp32>} : vector<8x64xf32>, vector<64x128xf32>, vector<8x128xf32> -> vector<8x128xf32>
    %c126_i32 = arith.constant 126 : i32
    %19 = tpu.dynamic_rotate %18 by %c126_i32 dim 1 : vector<8x128xf32>, i32 -> vector<8x128xf32>
    %c2_i32 = arith.constant 2 : i32
    %20 = vector.broadcast %c2_i32 : i32 to vector<8x128xi32>
    %21 = arith.addi %3, %20 : vector<8x128xi32>
    %c0_i32_6 = arith.constant 0 : i32
    %22 = vector.broadcast %c0_i32_6 : i32 to vector<8x128xi32>
    %23 = arith.cmpi sge, %21, %22 : vector<8x128xi32>
    %c2_i32_7 = arith.constant 2 : i32
    %24 = vector.broadcast %c2_i32_7 : i32 to vector<8x128xi32>
    %25 = arith.addi %3, %24 : vector<8x128xi32>
    %c128_i32 = arith.constant 128 : i32
    %26 = vector.broadcast %c128_i32 : i32 to vector<8x128xi32>
    %27 = arith.cmpi slt, %25, %26 : vector<8x128xi32>
    %28 = arith.andi %23, %27 : vector<8x128xi1>
    %cst_8 = arith.constant 0.000000e+00 : f32
    %29 = vector.broadcast %cst_8 : f32 to vector<8x128xf32>
    %30 = arith.select %28, %19, %29 : vector<8x128xi1>, vector<8x128xf32>
    %31 = vector.extract_strided_slice %0 {offsets = [0, 7], sizes = [8, 1], strides = [1, 1]} : vector<8x84xf32> to vector<8x1xf32>
    %c3_i32 = arith.constant 3 : i32
    %32 = tpu.dynamic_rotate %18 by %c3_i32 dim 0 : vector<8x128xf32>, i32 -> vector<8x128xf32>
    %33 = vector.broadcast %31 : vector<8x1xf32> to vector<8x128xf32>
    %34 = arith.mulf %33, %32 : vector<8x128xf32>
    %35 = vector.extract_strided_slice %0 {offsets = [0, 8], sizes = [8, 1], strides = [1, 1]} : vector<8x84xf32> to vector<8x1xf32>
    %c2_i32_9 = arith.constant 2 : i32
    %36 = tpu.dynamic_rotate %18 by %c2_i32_9 dim 0 : vector<8x128xf32>, i32 -> vector<8x128xf32>
    %37 = vector.broadcast %35 : vector<8x1xf32> to vector<8x128xf32>
    %38 = arith.mulf %37, %36 : vector<8x128xf32>
    %39 = arith.addf %34, %38 : vector<8x128xf32>
    %40 = vector.extract_strided_slice %0 {offsets = [0, 9], sizes = [8, 1], strides = [1, 1]} : vector<8x84xf32> to vector<8x1xf32>
    %c1_i32_10 = arith.constant 1 : i32
    %41 = tpu.dynamic_rotate %18 by %c1_i32_10 dim 0 : vector<8x128xf32>, i32 -> vector<8x128xf32>
    %42 = vector.broadcast %40 : vector<8x1xf32> to vector<8x128xf32>
    %43 = arith.mulf %42, %41 : vector<8x128xf32>
    %44 = arith.addf %39, %43 : vector<8x128xf32>
    %45 = vector.extract_strided_slice %0 {offsets = [0, 10], sizes = [8, 1], strides = [1, 1]} : vector<8x84xf32> to vector<8x1xf32>
    %46 = vector.broadcast %45 : vector<8x1xf32> to vector<8x128xf32>
    %47 = arith.mulf %46, %18 : vector<8x128xf32>
    %48 = arith.addf %44, %47 : vector<8x128xf32>
    %49 = vector.extract_strided_slice %0 {offsets = [0, 11], sizes = [8, 1], strides = [1, 1]} : vector<8x84xf32> to vector<8x1xf32>
    %c7_i32 = arith.constant 7 : i32
    %50 = tpu.dynamic_rotate %18 by %c7_i32 dim 0 : vector<8x128xf32>, i32 -> vector<8x128xf32>
    %51 = vector.broadcast %49 : vector<8x1xf32> to vector<8x128xf32>
    %52 = arith.mulf %51, %50 : vector<8x128xf32>
    %53 = arith.addf %48, %52 : vector<8x128xf32>
    %54 = vector.extract_strided_slice %0 {offsets = [0, 12], sizes = [8, 1], strides = [1, 1]} : vector<8x84xf32> to vector<8x1xf32>
    %c6_i32 = arith.constant 6 : i32
    %55 = tpu.dynamic_rotate %18 by %c6_i32 dim 0 : vector<8x128xf32>, i32 -> vector<8x128xf32>
    %56 = vector.broadcast %54 : vector<8x1xf32> to vector<8x128xf32>
    %57 = arith.mulf %56, %55 : vector<8x128xf32>
    %58 = arith.addf %53, %57 : vector<8x128xf32>
    %59 = vector.extract_strided_slice %0 {offsets = [0, 13], sizes = [8, 1], strides = [1, 1]} : vector<8x84xf32> to vector<8x1xf32>
    %c5_i32 = arith.constant 5 : i32
    %60 = tpu.dynamic_rotate %18 by %c5_i32 dim 0 : vector<8x128xf32>, i32 -> vector<8x128xf32>
    %61 = vector.broadcast %59 : vector<8x1xf32> to vector<8x128xf32>
    %62 = arith.mulf %61, %60 : vector<8x128xf32>
    %63 = arith.addf %58, %62 : vector<8x128xf32>
    %64 = vector.extract_strided_slice %0 {offsets = [0, 0], sizes = [8, 1], strides = [1, 1]} : vector<8x84xf32> to vector<8x1xf32>
    %c3_i32_11 = arith.constant 3 : i32
    %65 = tpu.dynamic_rotate %18 by %c3_i32_11 dim 0 : vector<8x128xf32>, i32 -> vector<8x128xf32>
    %66 = vector.broadcast %64 : vector<8x1xf32> to vector<8x128xf32>
    %67 = arith.mulf %66, %65 : vector<8x128xf32>
    %68 = vector.extract_strided_slice %0 {offsets = [0, 1], sizes = [8, 1], strides = [1, 1]} : vector<8x84xf32> to vector<8x1xf32>
    %c2_i32_12 = arith.constant 2 : i32
    %69 = tpu.dynamic_rotate %18 by %c2_i32_12 dim 0 : vector<8x128xf32>, i32 -> vector<8x128xf32>
    %70 = vector.broadcast %68 : vector<8x1xf32> to vector<8x128xf32>
    %71 = arith.mulf %70, %69 : vector<8x128xf32>
    %72 = arith.addf %67, %71 : vector<8x128xf32>
    %73 = vector.extract_strided_slice %0 {offsets = [0, 2], sizes = [8, 1], strides = [1, 1]} : vector<8x84xf32> to vector<8x1xf32>
    %c1_i32_13 = arith.constant 1 : i32
    %74 = tpu.dynamic_rotate %18 by %c1_i32_13 dim 0 : vector<8x128xf32>, i32 -> vector<8x128xf32>
    %75 = vector.broadcast %73 : vector<8x1xf32> to vector<8x128xf32>
    %76 = arith.mulf %75, %74 : vector<8x128xf32>
    %77 = arith.addf %72, %76 : vector<8x128xf32>
    %78 = vector.extract_strided_slice %0 {offsets = [0, 3], sizes = [8, 1], strides = [1, 1]} : vector<8x84xf32> to vector<8x1xf32>
    %79 = vector.broadcast %78 : vector<8x1xf32> to vector<8x128xf32>
    %80 = arith.mulf %79, %18 : vector<8x128xf32>
    %81 = arith.addf %77, %80 : vector<8x128xf32>
    %82 = vector.extract_strided_slice %0 {offsets = [0, 4], sizes = [8, 1], strides = [1, 1]} : vector<8x84xf32> to vector<8x1xf32>
    %c7_i32_14 = arith.constant 7 : i32
    %83 = tpu.dynamic_rotate %18 by %c7_i32_14 dim 0 : vector<8x128xf32>, i32 -> vector<8x128xf32>
    %84 = vector.broadcast %82 : vector<8x1xf32> to vector<8x128xf32>
    %85 = arith.mulf %84, %83 : vector<8x128xf32>
    %86 = arith.addf %81, %85 : vector<8x128xf32>
    %87 = vector.extract_strided_slice %0 {offsets = [0, 5], sizes = [8, 1], strides = [1, 1]} : vector<8x84xf32> to vector<8x1xf32>
    %c6_i32_15 = arith.constant 6 : i32
    %88 = tpu.dynamic_rotate %18 by %c6_i32_15 dim 0 : vector<8x128xf32>, i32 -> vector<8x128xf32>
    %89 = vector.broadcast %87 : vector<8x1xf32> to vector<8x128xf32>
    %90 = arith.mulf %89, %88 : vector<8x128xf32>
    %91 = arith.addf %86, %90 : vector<8x128xf32>
    %92 = vector.extract_strided_slice %0 {offsets = [0, 6], sizes = [8, 1], strides = [1, 1]} : vector<8x84xf32> to vector<8x1xf32>
    %c5_i32_16 = arith.constant 5 : i32
    %93 = tpu.dynamic_rotate %18 by %c5_i32_16 dim 0 : vector<8x128xf32>, i32 -> vector<8x128xf32>
    %94 = vector.broadcast %92 : vector<8x1xf32> to vector<8x128xf32>
    %95 = arith.mulf %94, %93 : vector<8x128xf32>
    %96 = arith.addf %91, %95 : vector<8x128xf32>
    %97 = vector.extract_strided_slice %0 {offsets = [0, 14], sizes = [8, 1], strides = [1, 1]} : vector<8x84xf32> to vector<8x1xf32>
    %c3_i32_17 = arith.constant 3 : i32
    %98 = tpu.dynamic_rotate %30 by %c3_i32_17 dim 0 : vector<8x128xf32>, i32 -> vector<8x128xf32>
    %99 = vector.broadcast %97 : vector<8x1xf32> to vector<8x128xf32>
    %100 = arith.mulf %99, %98 : vector<8x128xf32>
    %101 = vector.extract_strided_slice %0 {offsets = [0, 15], sizes = [8, 1], strides = [1, 1]} : vector<8x84xf32> to vector<8x1xf32>
    %c2_i32_18 = arith.constant 2 : i32
    %102 = tpu.dynamic_rotate %30 by %c2_i32_18 dim 0 : vector<8x128xf32>, i32 -> vector<8x128xf32>
    %103 = vector.broadcast %101 : vector<8x1xf32> to vector<8x128xf32>
    %104 = arith.mulf %103, %102 : vector<8x128xf32>
    %105 = arith.addf %100, %104 : vector<8x128xf32>
    %106 = vector.extract_strided_slice %0 {offsets = [0, 16], sizes = [8, 1], strides = [1, 1]} : vector<8x84xf32> to vector<8x1xf32>
    %c1_i32_19 = arith.constant 1 : i32
    %107 = tpu.dynamic_rotate %30 by %c1_i32_19 dim 0 : vector<8x128xf32>, i32 -> vector<8x128xf32>
    %108 = vector.broadcast %106 : vector<8x1xf32> to vector<8x128xf32>
    %109 = arith.mulf %108, %107 : vector<8x128xf32>
    %110 = arith.addf %105, %109 : vector<8x128xf32>
    %111 = vector.extract_strided_slice %0 {offsets = [0, 17], sizes = [8, 1], strides = [1, 1]} : vector<8x84xf32> to vector<8x1xf32>
    %112 = vector.broadcast %111 : vector<8x1xf32> to vector<8x128xf32>
    %113 = arith.mulf %112, %30 : vector<8x128xf32>
    %114 = arith.addf %110, %113 : vector<8x128xf32>
    %115 = vector.extract_strided_slice %0 {offsets = [0, 18], sizes = [8, 1], strides = [1, 1]} : vector<8x84xf32> to vector<8x1xf32>
    %c7_i32_20 = arith.constant 7 : i32
    %116 = tpu.dynamic_rotate %30 by %c7_i32_20 dim 0 : vector<8x128xf32>, i32 -> vector<8x128xf32>
    %117 = vector.broadcast %115 : vector<8x1xf32> to vector<8x128xf32>
    %118 = arith.mulf %117, %116 : vector<8x128xf32>
    %119 = arith.addf %114, %118 : vector<8x128xf32>
    %120 = vector.extract_strided_slice %0 {offsets = [0, 19], sizes = [8, 1], strides = [1, 1]} : vector<8x84xf32> to vector<8x1xf32>
    %c6_i32_21 = arith.constant 6 : i32
    %121 = tpu.dynamic_rotate %30 by %c6_i32_21 dim 0 : vector<8x128xf32>, i32 -> vector<8x128xf32>
    %122 = vector.broadcast %120 : vector<8x1xf32> to vector<8x128xf32>
    %123 = arith.mulf %122, %121 : vector<8x128xf32>
    %124 = arith.addf %119, %123 : vector<8x128xf32>
    %125 = vector.extract_strided_slice %0 {offsets = [0, 20], sizes = [8, 1], strides = [1, 1]} : vector<8x84xf32> to vector<8x1xf32>
    %c5_i32_22 = arith.constant 5 : i32
    %126 = tpu.dynamic_rotate %30 by %c5_i32_22 dim 0 : vector<8x128xf32>, i32 -> vector<8x128xf32>
    %127 = vector.broadcast %125 : vector<8x1xf32> to vector<8x128xf32>
    %128 = arith.mulf %127, %126 : vector<8x128xf32>
    %129 = arith.addf %124, %128 : vector<8x128xf32>
    %130 = arith.addf %96, %129 : vector<8x128xf32>
    %131 = arith.select %7, %63, %130 : vector<8x128xi1>, vector<8x128xf32>
    %132 = vector.extract_strided_slice %1 {offsets = [0, 0], sizes = [8, 1], strides = [1, 1]} : vector<8x4xf32> to vector<8x1xf32>
    %133 = vector.broadcast %132 : vector<8x1xf32> to vector<8x128xf32>
    %134 = arith.addf %131, %133 : vector<8x128xf32>
    %c4_i32 = arith.constant 4 : i32
    %135 = tpu.dynamic_rotate %134 by %c4_i32 dim 1 : vector<8x128xf32>, i32 -> vector<8x128xf32>
    %c-4_i32 = arith.constant -4 : i32
    %136 = vector.broadcast %c-4_i32 : i32 to vector<8x128xi32>
    %137 = arith.addi %3, %136 : vector<8x128xi32>
    %c0_i32_23 = arith.constant 0 : i32
    %138 = vector.broadcast %c0_i32_23 : i32 to vector<8x128xi32>
    %139 = arith.cmpi sge, %137, %138 : vector<8x128xi32>
    %c-4_i32_24 = arith.constant -4 : i32
    %140 = vector.broadcast %c-4_i32_24 : i32 to vector<8x128xi32>
    %141 = arith.addi %3, %140 : vector<8x128xi32>
    %c128_i32_25 = arith.constant 128 : i32
    %142 = vector.broadcast %c128_i32_25 : i32 to vector<8x128xi32>
    %143 = arith.cmpi slt, %141, %142 : vector<8x128xi32>
    %144 = arith.andi %139, %143 : vector<8x128xi1>
    %cst_26 = arith.constant 0.000000e+00 : f32
    %145 = vector.broadcast %cst_26 : f32 to vector<8x128xf32>
    %146 = arith.select %144, %135, %145 : vector<8x128xi1>, vector<8x128xf32>
    %147 = vector.extract_strided_slice %0 {offsets = [0, 21], sizes = [8, 1], strides = [1, 1]} : vector<8x84xf32> to vector<8x1xf32>
    %c3_i32_27 = arith.constant 3 : i32
    %148 = tpu.dynamic_rotate %146 by %c3_i32_27 dim 0 : vector<8x128xf32>, i32 -> vector<8x128xf32>
    %149 = vector.broadcast %147 : vector<8x1xf32> to vector<8x128xf32>
    %150 = arith.mulf %149, %148 : vector<8x128xf32>
    %151 = vector.extract_strided_slice %0 {offsets = [0, 22], sizes = [8, 1], strides = [1, 1]} : vector<8x84xf32> to vector<8x1xf32>
    %c2_i32_28 = arith.constant 2 : i32
    %152 = tpu.dynamic_rotate %146 by %c2_i32_28 dim 0 : vector<8x128xf32>, i32 -> vector<8x128xf32>
    %153 = vector.broadcast %151 : vector<8x1xf32> to vector<8x128xf32>
    %154 = arith.mulf %153, %152 : vector<8x128xf32>
    %155 = arith.addf %150, %154 : vector<8x128xf32>
    %156 = vector.extract_strided_slice %0 {offsets = [0, 23], sizes = [8, 1], strides = [1, 1]} : vector<8x84xf32> to vector<8x1xf32>
    %c1_i32_29 = arith.constant 1 : i32
    %157 = tpu.dynamic_rotate %146 by %c1_i32_29 dim 0 : vector<8x128xf32>, i32 -> vector<8x128xf32>
    %158 = vector.broadcast %156 : vector<8x1xf32> to vector<8x128xf32>
    %159 = arith.mulf %158, %157 : vector<8x128xf32>
    %160 = arith.addf %155, %159 : vector<8x128xf32>
    %161 = vector.extract_strided_slice %0 {offsets = [0, 24], sizes = [8, 1], strides = [1, 1]} : vector<8x84xf32> to vector<8x1xf32>
    %162 = vector.broadcast %161 : vector<8x1xf32> to vector<8x128xf32>
    %163 = arith.mulf %162, %146 : vector<8x128xf32>
    %164 = arith.addf %160, %163 : vector<8x128xf32>
    %165 = vector.extract_strided_slice %0 {offsets = [0, 25], sizes = [8, 1], strides = [1, 1]} : vector<8x84xf32> to vector<8x1xf32>
    %c7_i32_30 = arith.constant 7 : i32
    %166 = tpu.dynamic_rotate %146 by %c7_i32_30 dim 0 : vector<8x128xf32>, i32 -> vector<8x128xf32>
    %167 = vector.broadcast %165 : vector<8x1xf32> to vector<8x128xf32>
    %168 = arith.mulf %167, %166 : vector<8x128xf32>
    %169 = arith.addf %164, %168 : vector<8x128xf32>
    %170 = vector.extract_strided_slice %0 {offsets = [0, 26], sizes = [8, 1], strides = [1, 1]} : vector<8x84xf32> to vector<8x1xf32>
    %c6_i32_31 = arith.constant 6 : i32
    %171 = tpu.dynamic_rotate %146 by %c6_i32_31 dim 0 : vector<8x128xf32>, i32 -> vector<8x128xf32>
    %172 = vector.broadcast %170 : vector<8x1xf32> to vector<8x128xf32>
    %173 = arith.mulf %172, %171 : vector<8x128xf32>
    %174 = arith.addf %169, %173 : vector<8x128xf32>
    %175 = vector.extract_strided_slice %0 {offsets = [0, 27], sizes = [8, 1], strides = [1, 1]} : vector<8x84xf32> to vector<8x1xf32>
    %c5_i32_32 = arith.constant 5 : i32
    %176 = tpu.dynamic_rotate %146 by %c5_i32_32 dim 0 : vector<8x128xf32>, i32 -> vector<8x128xf32>
    %177 = vector.broadcast %175 : vector<8x1xf32> to vector<8x128xf32>
    %178 = arith.mulf %177, %176 : vector<8x128xf32>
    %179 = arith.addf %174, %178 : vector<8x128xf32>
    %180 = vector.extract_strided_slice %0 {offsets = [0, 28], sizes = [8, 1], strides = [1, 1]} : vector<8x84xf32> to vector<8x1xf32>
    %c3_i32_33 = arith.constant 3 : i32
    %181 = tpu.dynamic_rotate %134 by %c3_i32_33 dim 0 : vector<8x128xf32>, i32 -> vector<8x128xf32>
    %182 = vector.broadcast %180 : vector<8x1xf32> to vector<8x128xf32>
    %183 = arith.mulf %182, %181 : vector<8x128xf32>
    %184 = vector.extract_strided_slice %0 {offsets = [0, 29], sizes = [8, 1], strides = [1, 1]} : vector<8x84xf32> to vector<8x1xf32>
    %c2_i32_34 = arith.constant 2 : i32
    %185 = tpu.dynamic_rotate %134 by %c2_i32_34 dim 0 : vector<8x128xf32>, i32 -> vector<8x128xf32>
    %186 = vector.broadcast %184 : vector<8x1xf32> to vector<8x128xf32>
    %187 = arith.mulf %186, %185 : vector<8x128xf32>
    %188 = arith.addf %183, %187 : vector<8x128xf32>
    %189 = vector.extract_strided_slice %0 {offsets = [0, 30], sizes = [8, 1], strides = [1, 1]} : vector<8x84xf32> to vector<8x1xf32>
    %c1_i32_35 = arith.constant 1 : i32
    %190 = tpu.dynamic_rotate %134 by %c1_i32_35 dim 0 : vector<8x128xf32>, i32 -> vector<8x128xf32>
    %191 = vector.broadcast %189 : vector<8x1xf32> to vector<8x128xf32>
    %192 = arith.mulf %191, %190 : vector<8x128xf32>
    %193 = arith.addf %188, %192 : vector<8x128xf32>
    %194 = vector.extract_strided_slice %0 {offsets = [0, 31], sizes = [8, 1], strides = [1, 1]} : vector<8x84xf32> to vector<8x1xf32>
    %195 = vector.broadcast %194 : vector<8x1xf32> to vector<8x128xf32>
    %196 = arith.mulf %195, %134 : vector<8x128xf32>
    %197 = arith.addf %193, %196 : vector<8x128xf32>
    %198 = vector.extract_strided_slice %0 {offsets = [0, 32], sizes = [8, 1], strides = [1, 1]} : vector<8x84xf32> to vector<8x1xf32>
    %c7_i32_36 = arith.constant 7 : i32
    %199 = tpu.dynamic_rotate %134 by %c7_i32_36 dim 0 : vector<8x128xf32>, i32 -> vector<8x128xf32>
    %200 = vector.broadcast %198 : vector<8x1xf32> to vector<8x128xf32>
    %201 = arith.mulf %200, %199 : vector<8x128xf32>
    %202 = arith.addf %197, %201 : vector<8x128xf32>
    %203 = vector.extract_strided_slice %0 {offsets = [0, 33], sizes = [8, 1], strides = [1, 1]} : vector<8x84xf32> to vector<8x1xf32>
    %c6_i32_37 = arith.constant 6 : i32
    %204 = tpu.dynamic_rotate %134 by %c6_i32_37 dim 0 : vector<8x128xf32>, i32 -> vector<8x128xf32>
    %205 = vector.broadcast %203 : vector<8x1xf32> to vector<8x128xf32>
    %206 = arith.mulf %205, %204 : vector<8x128xf32>
    %207 = arith.addf %202, %206 : vector<8x128xf32>
    %208 = vector.extract_strided_slice %0 {offsets = [0, 34], sizes = [8, 1], strides = [1, 1]} : vector<8x84xf32> to vector<8x1xf32>
    %c5_i32_38 = arith.constant 5 : i32
    %209 = tpu.dynamic_rotate %134 by %c5_i32_38 dim 0 : vector<8x128xf32>, i32 -> vector<8x128xf32>
    %210 = vector.broadcast %208 : vector<8x1xf32> to vector<8x128xf32>
    %211 = arith.mulf %210, %209 : vector<8x128xf32>
    %212 = arith.addf %207, %211 : vector<8x128xf32>
    %213 = arith.addf %179, %212 : vector<8x128xf32>
    %c124_i32 = arith.constant 124 : i32
    %214 = tpu.dynamic_rotate %134 by %c124_i32 dim 1 : vector<8x128xf32>, i32 -> vector<8x128xf32>
    %c4_i32_39 = arith.constant 4 : i32
    %215 = vector.broadcast %c4_i32_39 : i32 to vector<8x128xi32>
    %216 = arith.addi %3, %215 : vector<8x128xi32>
    %c0_i32_40 = arith.constant 0 : i32
    %217 = vector.broadcast %c0_i32_40 : i32 to vector<8x128xi32>
    %218 = arith.cmpi sge, %216, %217 : vector<8x128xi32>
    %c4_i32_41 = arith.constant 4 : i32
    %219 = vector.broadcast %c4_i32_41 : i32 to vector<8x128xi32>
    %220 = arith.addi %3, %219 : vector<8x128xi32>
    %c128_i32_42 = arith.constant 128 : i32
    %221 = vector.broadcast %c128_i32_42 : i32 to vector<8x128xi32>
    %222 = arith.cmpi slt, %220, %221 : vector<8x128xi32>
    %223 = arith.andi %218, %222 : vector<8x128xi1>
    %cst_43 = arith.constant 0.000000e+00 : f32
    %224 = vector.broadcast %cst_43 : f32 to vector<8x128xf32>
    %225 = arith.select %223, %214, %224 : vector<8x128xi1>, vector<8x128xf32>
    %226 = vector.extract_strided_slice %0 {offsets = [0, 35], sizes = [8, 1], strides = [1, 1]} : vector<8x84xf32> to vector<8x1xf32>
    %c3_i32_44 = arith.constant 3 : i32
    %227 = tpu.dynamic_rotate %225 by %c3_i32_44 dim 0 : vector<8x128xf32>, i32 -> vector<8x128xf32>
    %228 = vector.broadcast %226 : vector<8x1xf32> to vector<8x128xf32>
    %229 = arith.mulf %228, %227 : vector<8x128xf32>
    %230 = vector.extract_strided_slice %0 {offsets = [0, 36], sizes = [8, 1], strides = [1, 1]} : vector<8x84xf32> to vector<8x1xf32>
    %c2_i32_45 = arith.constant 2 : i32
    %231 = tpu.dynamic_rotate %225 by %c2_i32_45 dim 0 : vector<8x128xf32>, i32 -> vector<8x128xf32>
    %232 = vector.broadcast %230 : vector<8x1xf32> to vector<8x128xf32>
    %233 = arith.mulf %232, %231 : vector<8x128xf32>
    %234 = arith.addf %229, %233 : vector<8x128xf32>
    %235 = vector.extract_strided_slice %0 {offsets = [0, 37], sizes = [8, 1], strides = [1, 1]} : vector<8x84xf32> to vector<8x1xf32>
    %c1_i32_46 = arith.constant 1 : i32
    %236 = tpu.dynamic_rotate %225 by %c1_i32_46 dim 0 : vector<8x128xf32>, i32 -> vector<8x128xf32>
    %237 = vector.broadcast %235 : vector<8x1xf32> to vector<8x128xf32>
    %238 = arith.mulf %237, %236 : vector<8x128xf32>
    %239 = arith.addf %234, %238 : vector<8x128xf32>
    %240 = vector.extract_strided_slice %0 {offsets = [0, 38], sizes = [8, 1], strides = [1, 1]} : vector<8x84xf32> to vector<8x1xf32>
    %241 = vector.broadcast %240 : vector<8x1xf32> to vector<8x128xf32>
    %242 = arith.mulf %241, %225 : vector<8x128xf32>
    %243 = arith.addf %239, %242 : vector<8x128xf32>
    %244 = vector.extract_strided_slice %0 {offsets = [0, 39], sizes = [8, 1], strides = [1, 1]} : vector<8x84xf32> to vector<8x1xf32>
    %c7_i32_47 = arith.constant 7 : i32
    %245 = tpu.dynamic_rotate %225 by %c7_i32_47 dim 0 : vector<8x128xf32>, i32 -> vector<8x128xf32>
    %246 = vector.broadcast %244 : vector<8x1xf32> to vector<8x128xf32>
    %247 = arith.mulf %246, %245 : vector<8x128xf32>
    %248 = arith.addf %243, %247 : vector<8x128xf32>
    %249 = vector.extract_strided_slice %0 {offsets = [0, 40], sizes = [8, 1], strides = [1, 1]} : vector<8x84xf32> to vector<8x1xf32>
    %c6_i32_48 = arith.constant 6 : i32
    %250 = tpu.dynamic_rotate %225 by %c6_i32_48 dim 0 : vector<8x128xf32>, i32 -> vector<8x128xf32>
    %251 = vector.broadcast %249 : vector<8x1xf32> to vector<8x128xf32>
    %252 = arith.mulf %251, %250 : vector<8x128xf32>
    %253 = arith.addf %248, %252 : vector<8x128xf32>
    %254 = vector.extract_strided_slice %0 {offsets = [0, 41], sizes = [8, 1], strides = [1, 1]} : vector<8x84xf32> to vector<8x1xf32>
    %c5_i32_49 = arith.constant 5 : i32
    %255 = tpu.dynamic_rotate %225 by %c5_i32_49 dim 0 : vector<8x128xf32>, i32 -> vector<8x128xf32>
    %256 = vector.broadcast %254 : vector<8x1xf32> to vector<8x128xf32>
    %257 = arith.mulf %256, %255 : vector<8x128xf32>
    %258 = arith.addf %253, %257 : vector<8x128xf32>
    %259 = arith.addf %213, %258 : vector<8x128xf32>
    %260 = vector.extract_strided_slice %1 {offsets = [0, 1], sizes = [8, 1], strides = [1, 1]} : vector<8x4xf32> to vector<8x1xf32>
    %261 = vector.broadcast %260 : vector<8x1xf32> to vector<8x128xf32>
    %262 = arith.addf %259, %261 : vector<8x128xf32>
    %cst_50 = arith.constant 0.000000e+00 : f32
    %263 = vector.broadcast %cst_50 : f32 to vector<8x128xf32>
    %264 = arith.subf %263, %262 : vector<8x128xf32>
    %265 = math.exp %264 : vector<8x128xf32>
    %cst_51 = arith.constant 1.000000e+00 : f32
    %266 = vector.broadcast %cst_51 : f32 to vector<8x128xf32>
    %267 = arith.addf %266, %265 : vector<8x128xf32>
    %268 = tpu.reciprocal %267 : vector<8x128xf32> -> vector<8x128xf32>
    %269 = arith.mulf %262, %268 : vector<8x128xf32>
    %c2_i32_52 = arith.constant 2 : i32
    %270 = tpu.dynamic_rotate %269 by %c2_i32_52 dim 1 : vector<8x128xf32>, i32 -> vector<8x128xf32>
    %c-2_i32 = arith.constant -2 : i32
    %271 = vector.broadcast %c-2_i32 : i32 to vector<8x128xi32>
    %272 = arith.addi %3, %271 : vector<8x128xi32>
    %c0_i32_53 = arith.constant 0 : i32
    %273 = vector.broadcast %c0_i32_53 : i32 to vector<8x128xi32>
    %274 = arith.cmpi sge, %272, %273 : vector<8x128xi32>
    %c-2_i32_54 = arith.constant -2 : i32
    %275 = vector.broadcast %c-2_i32_54 : i32 to vector<8x128xi32>
    %276 = arith.addi %3, %275 : vector<8x128xi32>
    %c128_i32_55 = arith.constant 128 : i32
    %277 = vector.broadcast %c128_i32_55 : i32 to vector<8x128xi32>
    %278 = arith.cmpi slt, %276, %277 : vector<8x128xi32>
    %279 = arith.andi %274, %278 : vector<8x128xi1>
    %cst_56 = arith.constant 0.000000e+00 : f32
    %280 = vector.broadcast %cst_56 : f32 to vector<8x128xf32>
    %281 = arith.select %279, %270, %280 : vector<8x128xi1>, vector<8x128xf32>
    %282 = vector.extract_strided_slice %0 {offsets = [0, 42], sizes = [8, 1], strides = [1, 1]} : vector<8x84xf32> to vector<8x1xf32>
    %c3_i32_57 = arith.constant 3 : i32
    %283 = tpu.dynamic_rotate %281 by %c3_i32_57 dim 0 : vector<8x128xf32>, i32 -> vector<8x128xf32>
    %284 = vector.broadcast %282 : vector<8x1xf32> to vector<8x128xf32>
    %285 = arith.mulf %284, %283 : vector<8x128xf32>
    %286 = vector.extract_strided_slice %0 {offsets = [0, 43], sizes = [8, 1], strides = [1, 1]} : vector<8x84xf32> to vector<8x1xf32>
    %c2_i32_58 = arith.constant 2 : i32
    %287 = tpu.dynamic_rotate %281 by %c2_i32_58 dim 0 : vector<8x128xf32>, i32 -> vector<8x128xf32>
    %288 = vector.broadcast %286 : vector<8x1xf32> to vector<8x128xf32>
    %289 = arith.mulf %288, %287 : vector<8x128xf32>
    %290 = arith.addf %285, %289 : vector<8x128xf32>
    %291 = vector.extract_strided_slice %0 {offsets = [0, 44], sizes = [8, 1], strides = [1, 1]} : vector<8x84xf32> to vector<8x1xf32>
    %c1_i32_59 = arith.constant 1 : i32
    %292 = tpu.dynamic_rotate %281 by %c1_i32_59 dim 0 : vector<8x128xf32>, i32 -> vector<8x128xf32>
    %293 = vector.broadcast %291 : vector<8x1xf32> to vector<8x128xf32>
    %294 = arith.mulf %293, %292 : vector<8x128xf32>
    %295 = arith.addf %290, %294 : vector<8x128xf32>
    %296 = vector.extract_strided_slice %0 {offsets = [0, 45], sizes = [8, 1], strides = [1, 1]} : vector<8x84xf32> to vector<8x1xf32>
    %297 = vector.broadcast %296 : vector<8x1xf32> to vector<8x128xf32>
    %298 = arith.mulf %297, %281 : vector<8x128xf32>
    %299 = arith.addf %295, %298 : vector<8x128xf32>
    %300 = vector.extract_strided_slice %0 {offsets = [0, 46], sizes = [8, 1], strides = [1, 1]} : vector<8x84xf32> to vector<8x1xf32>
    %c7_i32_60 = arith.constant 7 : i32
    %301 = tpu.dynamic_rotate %281 by %c7_i32_60 dim 0 : vector<8x128xf32>, i32 -> vector<8x128xf32>
    %302 = vector.broadcast %300 : vector<8x1xf32> to vector<8x128xf32>
    %303 = arith.mulf %302, %301 : vector<8x128xf32>
    %304 = arith.addf %299, %303 : vector<8x128xf32>
    %305 = vector.extract_strided_slice %0 {offsets = [0, 47], sizes = [8, 1], strides = [1, 1]} : vector<8x84xf32> to vector<8x1xf32>
    %c6_i32_61 = arith.constant 6 : i32
    %306 = tpu.dynamic_rotate %281 by %c6_i32_61 dim 0 : vector<8x128xf32>, i32 -> vector<8x128xf32>
    %307 = vector.broadcast %305 : vector<8x1xf32> to vector<8x128xf32>
    %308 = arith.mulf %307, %306 : vector<8x128xf32>
    %309 = arith.addf %304, %308 : vector<8x128xf32>
    %310 = vector.extract_strided_slice %0 {offsets = [0, 48], sizes = [8, 1], strides = [1, 1]} : vector<8x84xf32> to vector<8x1xf32>
    %c5_i32_62 = arith.constant 5 : i32
    %311 = tpu.dynamic_rotate %281 by %c5_i32_62 dim 0 : vector<8x128xf32>, i32 -> vector<8x128xf32>
    %312 = vector.broadcast %310 : vector<8x1xf32> to vector<8x128xf32>
    %313 = arith.mulf %312, %311 : vector<8x128xf32>
    %314 = arith.addf %309, %313 : vector<8x128xf32>
    %315 = vector.extract_strided_slice %0 {offsets = [0, 49], sizes = [8, 1], strides = [1, 1]} : vector<8x84xf32> to vector<8x1xf32>
    %c3_i32_63 = arith.constant 3 : i32
    %316 = tpu.dynamic_rotate %269 by %c3_i32_63 dim 0 : vector<8x128xf32>, i32 -> vector<8x128xf32>
    %317 = vector.broadcast %315 : vector<8x1xf32> to vector<8x128xf32>
    %318 = arith.mulf %317, %316 : vector<8x128xf32>
    %319 = vector.extract_strided_slice %0 {offsets = [0, 50], sizes = [8, 1], strides = [1, 1]} : vector<8x84xf32> to vector<8x1xf32>
    %c2_i32_64 = arith.constant 2 : i32
    %320 = tpu.dynamic_rotate %269 by %c2_i32_64 dim 0 : vector<8x128xf32>, i32 -> vector<8x128xf32>
    %321 = vector.broadcast %319 : vector<8x1xf32> to vector<8x128xf32>
    %322 = arith.mulf %321, %320 : vector<8x128xf32>
    %323 = arith.addf %318, %322 : vector<8x128xf32>
    %324 = vector.extract_strided_slice %0 {offsets = [0, 51], sizes = [8, 1], strides = [1, 1]} : vector<8x84xf32> to vector<8x1xf32>
    %c1_i32_65 = arith.constant 1 : i32
    %325 = tpu.dynamic_rotate %269 by %c1_i32_65 dim 0 : vector<8x128xf32>, i32 -> vector<8x128xf32>
    %326 = vector.broadcast %324 : vector<8x1xf32> to vector<8x128xf32>
    %327 = arith.mulf %326, %325 : vector<8x128xf32>
    %328 = arith.addf %323, %327 : vector<8x128xf32>
    %329 = vector.extract_strided_slice %0 {offsets = [0, 52], sizes = [8, 1], strides = [1, 1]} : vector<8x84xf32> to vector<8x1xf32>
    %330 = vector.broadcast %329 : vector<8x1xf32> to vector<8x128xf32>
    %331 = arith.mulf %330, %269 : vector<8x128xf32>
    %332 = arith.addf %328, %331 : vector<8x128xf32>
    %333 = vector.extract_strided_slice %0 {offsets = [0, 53], sizes = [8, 1], strides = [1, 1]} : vector<8x84xf32> to vector<8x1xf32>
    %c7_i32_66 = arith.constant 7 : i32
    %334 = tpu.dynamic_rotate %269 by %c7_i32_66 dim 0 : vector<8x128xf32>, i32 -> vector<8x128xf32>
    %335 = vector.broadcast %333 : vector<8x1xf32> to vector<8x128xf32>
    %336 = arith.mulf %335, %334 : vector<8x128xf32>
    %337 = arith.addf %332, %336 : vector<8x128xf32>
    %338 = vector.extract_strided_slice %0 {offsets = [0, 54], sizes = [8, 1], strides = [1, 1]} : vector<8x84xf32> to vector<8x1xf32>
    %c6_i32_67 = arith.constant 6 : i32
    %339 = tpu.dynamic_rotate %269 by %c6_i32_67 dim 0 : vector<8x128xf32>, i32 -> vector<8x128xf32>
    %340 = vector.broadcast %338 : vector<8x1xf32> to vector<8x128xf32>
    %341 = arith.mulf %340, %339 : vector<8x128xf32>
    %342 = arith.addf %337, %341 : vector<8x128xf32>
    %343 = vector.extract_strided_slice %0 {offsets = [0, 55], sizes = [8, 1], strides = [1, 1]} : vector<8x84xf32> to vector<8x1xf32>
    %c5_i32_68 = arith.constant 5 : i32
    %344 = tpu.dynamic_rotate %269 by %c5_i32_68 dim 0 : vector<8x128xf32>, i32 -> vector<8x128xf32>
    %345 = vector.broadcast %343 : vector<8x1xf32> to vector<8x128xf32>
    %346 = arith.mulf %345, %344 : vector<8x128xf32>
    %347 = arith.addf %342, %346 : vector<8x128xf32>
    %348 = arith.addf %314, %347 : vector<8x128xf32>
    %c126_i32_69 = arith.constant 126 : i32
    %349 = tpu.dynamic_rotate %269 by %c126_i32_69 dim 1 : vector<8x128xf32>, i32 -> vector<8x128xf32>
    %cst_70 = arith.constant 0.000000e+00 : f32
    %350 = vector.broadcast %cst_70 : f32 to vector<8x128xf32>
    %351 = arith.select %28, %349, %350 : vector<8x128xi1>, vector<8x128xf32>
    %352 = vector.extract_strided_slice %0 {offsets = [0, 56], sizes = [8, 1], strides = [1, 1]} : vector<8x84xf32> to vector<8x1xf32>
    %c3_i32_71 = arith.constant 3 : i32
    %353 = tpu.dynamic_rotate %351 by %c3_i32_71 dim 0 : vector<8x128xf32>, i32 -> vector<8x128xf32>
    %354 = vector.broadcast %352 : vector<8x1xf32> to vector<8x128xf32>
    %355 = arith.mulf %354, %353 : vector<8x128xf32>
    %356 = vector.extract_strided_slice %0 {offsets = [0, 57], sizes = [8, 1], strides = [1, 1]} : vector<8x84xf32> to vector<8x1xf32>
    %c2_i32_72 = arith.constant 2 : i32
    %357 = tpu.dynamic_rotate %351 by %c2_i32_72 dim 0 : vector<8x128xf32>, i32 -> vector<8x128xf32>
    %358 = vector.broadcast %356 : vector<8x1xf32> to vector<8x128xf32>
    %359 = arith.mulf %358, %357 : vector<8x128xf32>
    %360 = arith.addf %355, %359 : vector<8x128xf32>
    %361 = vector.extract_strided_slice %0 {offsets = [0, 58], sizes = [8, 1], strides = [1, 1]} : vector<8x84xf32> to vector<8x1xf32>
    %c1_i32_73 = arith.constant 1 : i32
    %362 = tpu.dynamic_rotate %351 by %c1_i32_73 dim 0 : vector<8x128xf32>, i32 -> vector<8x128xf32>
    %363 = vector.broadcast %361 : vector<8x1xf32> to vector<8x128xf32>
    %364 = arith.mulf %363, %362 : vector<8x128xf32>
    %365 = arith.addf %360, %364 : vector<8x128xf32>
    %366 = vector.extract_strided_slice %0 {offsets = [0, 59], sizes = [8, 1], strides = [1, 1]} : vector<8x84xf32> to vector<8x1xf32>
    %367 = vector.broadcast %366 : vector<8x1xf32> to vector<8x128xf32>
    %368 = arith.mulf %367, %351 : vector<8x128xf32>
    %369 = arith.addf %365, %368 : vector<8x128xf32>
    %370 = vector.extract_strided_slice %0 {offsets = [0, 60], sizes = [8, 1], strides = [1, 1]} : vector<8x84xf32> to vector<8x1xf32>
    %c7_i32_74 = arith.constant 7 : i32
    %371 = tpu.dynamic_rotate %351 by %c7_i32_74 dim 0 : vector<8x128xf32>, i32 -> vector<8x128xf32>
    %372 = vector.broadcast %370 : vector<8x1xf32> to vector<8x128xf32>
    %373 = arith.mulf %372, %371 : vector<8x128xf32>
    %374 = arith.addf %369, %373 : vector<8x128xf32>
    %375 = vector.extract_strided_slice %0 {offsets = [0, 61], sizes = [8, 1], strides = [1, 1]} : vector<8x84xf32> to vector<8x1xf32>
    %c6_i32_75 = arith.constant 6 : i32
    %376 = tpu.dynamic_rotate %351 by %c6_i32_75 dim 0 : vector<8x128xf32>, i32 -> vector<8x128xf32>
    %377 = vector.broadcast %375 : vector<8x1xf32> to vector<8x128xf32>
    %378 = arith.mulf %377, %376 : vector<8x128xf32>
    %379 = arith.addf %374, %378 : vector<8x128xf32>
    %380 = vector.extract_strided_slice %0 {offsets = [0, 62], sizes = [8, 1], strides = [1, 1]} : vector<8x84xf32> to vector<8x1xf32>
    %c5_i32_76 = arith.constant 5 : i32
    %381 = tpu.dynamic_rotate %351 by %c5_i32_76 dim 0 : vector<8x128xf32>, i32 -> vector<8x128xf32>
    %382 = vector.broadcast %380 : vector<8x1xf32> to vector<8x128xf32>
    %383 = arith.mulf %382, %381 : vector<8x128xf32>
    %384 = arith.addf %379, %383 : vector<8x128xf32>
    %385 = arith.addf %348, %384 : vector<8x128xf32>
    %386 = vector.extract_strided_slice %1 {offsets = [0, 2], sizes = [8, 1], strides = [1, 1]} : vector<8x4xf32> to vector<8x1xf32>
    %387 = vector.broadcast %386 : vector<8x1xf32> to vector<8x128xf32>
    %388 = arith.addf %385, %387 : vector<8x128xf32>
    %cst_77 = arith.constant 0.000000e+00 : f32
    %389 = vector.broadcast %cst_77 : f32 to vector<8x128xf32>
    %390 = arith.subf %389, %388 : vector<8x128xf32>
    %391 = math.exp %390 : vector<8x128xf32>
    %cst_78 = arith.constant 1.000000e+00 : f32
    %392 = vector.broadcast %cst_78 : f32 to vector<8x128xf32>
    %393 = arith.addf %392, %391 : vector<8x128xf32>
    %394 = tpu.reciprocal %393 : vector<8x128xf32> -> vector<8x128xf32>
    %395 = arith.mulf %388, %394 : vector<8x128xf32>
    %c1_i32_79 = arith.constant 1 : i32
    %396 = tpu.dynamic_rotate %395 by %c1_i32_79 dim 1 : vector<8x128xf32>, i32 -> vector<8x128xf32>
    %c-1_i32 = arith.constant -1 : i32
    %397 = vector.broadcast %c-1_i32 : i32 to vector<8x128xi32>
    %398 = arith.addi %3, %397 : vector<8x128xi32>
    %c0_i32_80 = arith.constant 0 : i32
    %399 = vector.broadcast %c0_i32_80 : i32 to vector<8x128xi32>
    %400 = arith.cmpi sge, %398, %399 : vector<8x128xi32>
    %c-1_i32_81 = arith.constant -1 : i32
    %401 = vector.broadcast %c-1_i32_81 : i32 to vector<8x128xi32>
    %402 = arith.addi %3, %401 : vector<8x128xi32>
    %c128_i32_82 = arith.constant 128 : i32
    %403 = vector.broadcast %c128_i32_82 : i32 to vector<8x128xi32>
    %404 = arith.cmpi slt, %402, %403 : vector<8x128xi32>
    %405 = arith.andi %400, %404 : vector<8x128xi1>
    %cst_83 = arith.constant 0.000000e+00 : f32
    %406 = vector.broadcast %cst_83 : f32 to vector<8x128xf32>
    %407 = arith.select %405, %396, %406 : vector<8x128xi1>, vector<8x128xf32>
    %408 = vector.extract_strided_slice %0 {offsets = [0, 63], sizes = [8, 1], strides = [1, 1]} : vector<8x84xf32> to vector<8x1xf32>
    %c3_i32_84 = arith.constant 3 : i32
    %409 = tpu.dynamic_rotate %407 by %c3_i32_84 dim 0 : vector<8x128xf32>, i32 -> vector<8x128xf32>
    %410 = vector.broadcast %408 : vector<8x1xf32> to vector<8x128xf32>
    %411 = arith.mulf %410, %409 : vector<8x128xf32>
    %412 = vector.extract_strided_slice %0 {offsets = [0, 64], sizes = [8, 1], strides = [1, 1]} : vector<8x84xf32> to vector<8x1xf32>
    %c2_i32_85 = arith.constant 2 : i32
    %413 = tpu.dynamic_rotate %407 by %c2_i32_85 dim 0 : vector<8x128xf32>, i32 -> vector<8x128xf32>
    %414 = vector.broadcast %412 : vector<8x1xf32> to vector<8x128xf32>
    %415 = arith.mulf %414, %413 : vector<8x128xf32>
    %416 = arith.addf %411, %415 : vector<8x128xf32>
    %417 = vector.extract_strided_slice %0 {offsets = [0, 65], sizes = [8, 1], strides = [1, 1]} : vector<8x84xf32> to vector<8x1xf32>
    %c1_i32_86 = arith.constant 1 : i32
    %418 = tpu.dynamic_rotate %407 by %c1_i32_86 dim 0 : vector<8x128xf32>, i32 -> vector<8x128xf32>
    %419 = vector.broadcast %417 : vector<8x1xf32> to vector<8x128xf32>
    %420 = arith.mulf %419, %418 : vector<8x128xf32>
    %421 = arith.addf %416, %420 : vector<8x128xf32>
    %422 = vector.extract_strided_slice %0 {offsets = [0, 66], sizes = [8, 1], strides = [1, 1]} : vector<8x84xf32> to vector<8x1xf32>
    %423 = vector.broadcast %422 : vector<8x1xf32> to vector<8x128xf32>
    %424 = arith.mulf %423, %407 : vector<8x128xf32>
    %425 = arith.addf %421, %424 : vector<8x128xf32>
    %426 = vector.extract_strided_slice %0 {offsets = [0, 67], sizes = [8, 1], strides = [1, 1]} : vector<8x84xf32> to vector<8x1xf32>
    %c7_i32_87 = arith.constant 7 : i32
    %427 = tpu.dynamic_rotate %407 by %c7_i32_87 dim 0 : vector<8x128xf32>, i32 -> vector<8x128xf32>
    %428 = vector.broadcast %426 : vector<8x1xf32> to vector<8x128xf32>
    %429 = arith.mulf %428, %427 : vector<8x128xf32>
    %430 = arith.addf %425, %429 : vector<8x128xf32>
    %431 = vector.extract_strided_slice %0 {offsets = [0, 68], sizes = [8, 1], strides = [1, 1]} : vector<8x84xf32> to vector<8x1xf32>
    %c6_i32_88 = arith.constant 6 : i32
    %432 = tpu.dynamic_rotate %407 by %c6_i32_88 dim 0 : vector<8x128xf32>, i32 -> vector<8x128xf32>
    %433 = vector.broadcast %431 : vector<8x1xf32> to vector<8x128xf32>
    %434 = arith.mulf %433, %432 : vector<8x128xf32>
    %435 = arith.addf %430, %434 : vector<8x128xf32>
    %436 = vector.extract_strided_slice %0 {offsets = [0, 69], sizes = [8, 1], strides = [1, 1]} : vector<8x84xf32> to vector<8x1xf32>
    %c5_i32_89 = arith.constant 5 : i32
    %437 = tpu.dynamic_rotate %407 by %c5_i32_89 dim 0 : vector<8x128xf32>, i32 -> vector<8x128xf32>
    %438 = vector.broadcast %436 : vector<8x1xf32> to vector<8x128xf32>
    %439 = arith.mulf %438, %437 : vector<8x128xf32>
    %440 = arith.addf %435, %439 : vector<8x128xf32>
    %441 = vector.extract_strided_slice %0 {offsets = [0, 70], sizes = [8, 1], strides = [1, 1]} : vector<8x84xf32> to vector<8x1xf32>
    %c3_i32_90 = arith.constant 3 : i32
    %442 = tpu.dynamic_rotate %395 by %c3_i32_90 dim 0 : vector<8x128xf32>, i32 -> vector<8x128xf32>
    %443 = vector.broadcast %441 : vector<8x1xf32> to vector<8x128xf32>
    %444 = arith.mulf %443, %442 : vector<8x128xf32>
    %445 = vector.extract_strided_slice %0 {offsets = [0, 71], sizes = [8, 1], strides = [1, 1]} : vector<8x84xf32> to vector<8x1xf32>
    %c2_i32_91 = arith.constant 2 : i32
    %446 = tpu.dynamic_rotate %395 by %c2_i32_91 dim 0 : vector<8x128xf32>, i32 -> vector<8x128xf32>
    %447 = vector.broadcast %445 : vector<8x1xf32> to vector<8x128xf32>
    %448 = arith.mulf %447, %446 : vector<8x128xf32>
    %449 = arith.addf %444, %448 : vector<8x128xf32>
    %450 = vector.extract_strided_slice %0 {offsets = [0, 72], sizes = [8, 1], strides = [1, 1]} : vector<8x84xf32> to vector<8x1xf32>
    %c1_i32_92 = arith.constant 1 : i32
    %451 = tpu.dynamic_rotate %395 by %c1_i32_92 dim 0 : vector<8x128xf32>, i32 -> vector<8x128xf32>
    %452 = vector.broadcast %450 : vector<8x1xf32> to vector<8x128xf32>
    %453 = arith.mulf %452, %451 : vector<8x128xf32>
    %454 = arith.addf %449, %453 : vector<8x128xf32>
    %455 = vector.extract_strided_slice %0 {offsets = [0, 73], sizes = [8, 1], strides = [1, 1]} : vector<8x84xf32> to vector<8x1xf32>
    %456 = vector.broadcast %455 : vector<8x1xf32> to vector<8x128xf32>
    %457 = arith.mulf %456, %395 : vector<8x128xf32>
    %458 = arith.addf %454, %457 : vector<8x128xf32>
    %459 = vector.extract_strided_slice %0 {offsets = [0, 74], sizes = [8, 1], strides = [1, 1]} : vector<8x84xf32> to vector<8x1xf32>
    %c7_i32_93 = arith.constant 7 : i32
    %460 = tpu.dynamic_rotate %395 by %c7_i32_93 dim 0 : vector<8x128xf32>, i32 -> vector<8x128xf32>
    %461 = vector.broadcast %459 : vector<8x1xf32> to vector<8x128xf32>
    %462 = arith.mulf %461, %460 : vector<8x128xf32>
    %463 = arith.addf %458, %462 : vector<8x128xf32>
    %464 = vector.extract_strided_slice %0 {offsets = [0, 75], sizes = [8, 1], strides = [1, 1]} : vector<8x84xf32> to vector<8x1xf32>
    %c6_i32_94 = arith.constant 6 : i32
    %465 = tpu.dynamic_rotate %395 by %c6_i32_94 dim 0 : vector<8x128xf32>, i32 -> vector<8x128xf32>
    %466 = vector.broadcast %464 : vector<8x1xf32> to vector<8x128xf32>
    %467 = arith.mulf %466, %465 : vector<8x128xf32>
    %468 = arith.addf %463, %467 : vector<8x128xf32>
    %469 = vector.extract_strided_slice %0 {offsets = [0, 76], sizes = [8, 1], strides = [1, 1]} : vector<8x84xf32> to vector<8x1xf32>
    %c5_i32_95 = arith.constant 5 : i32
    %470 = tpu.dynamic_rotate %395 by %c5_i32_95 dim 0 : vector<8x128xf32>, i32 -> vector<8x128xf32>
    %471 = vector.broadcast %469 : vector<8x1xf32> to vector<8x128xf32>
    %472 = arith.mulf %471, %470 : vector<8x128xf32>
    %473 = arith.addf %468, %472 : vector<8x128xf32>
    %474 = arith.addf %440, %473 : vector<8x128xf32>
    %c127_i32 = arith.constant 127 : i32
    %475 = tpu.dynamic_rotate %395 by %c127_i32 dim 1 : vector<8x128xf32>, i32 -> vector<8x128xf32>
    %c1_i32_96 = arith.constant 1 : i32
    %476 = vector.broadcast %c1_i32_96 : i32 to vector<8x128xi32>
    %477 = arith.addi %3, %476 : vector<8x128xi32>
    %c0_i32_97 = arith.constant 0 : i32
    %478 = vector.broadcast %c0_i32_97 : i32 to vector<8x128xi32>
    %479 = arith.cmpi sge, %477, %478 : vector<8x128xi32>
    %c1_i32_98 = arith.constant 1 : i32
    %480 = vector.broadcast %c1_i32_98 : i32 to vector<8x128xi32>
    %481 = arith.addi %3, %480 : vector<8x128xi32>
    %c128_i32_99 = arith.constant 128 : i32
    %482 = vector.broadcast %c128_i32_99 : i32 to vector<8x128xi32>
    %483 = arith.cmpi slt, %481, %482 : vector<8x128xi32>
    %484 = arith.andi %479, %483 : vector<8x128xi1>
    %cst_100 = arith.constant 0.000000e+00 : f32
    %485 = vector.broadcast %cst_100 : f32 to vector<8x128xf32>
    %486 = arith.select %484, %475, %485 : vector<8x128xi1>, vector<8x128xf32>
    %487 = vector.extract_strided_slice %0 {offsets = [0, 77], sizes = [8, 1], strides = [1, 1]} : vector<8x84xf32> to vector<8x1xf32>
    %c3_i32_101 = arith.constant 3 : i32
    %488 = tpu.dynamic_rotate %486 by %c3_i32_101 dim 0 : vector<8x128xf32>, i32 -> vector<8x128xf32>
    %489 = vector.broadcast %487 : vector<8x1xf32> to vector<8x128xf32>
    %490 = arith.mulf %489, %488 : vector<8x128xf32>
    %491 = vector.extract_strided_slice %0 {offsets = [0, 78], sizes = [8, 1], strides = [1, 1]} : vector<8x84xf32> to vector<8x1xf32>
    %c2_i32_102 = arith.constant 2 : i32
    %492 = tpu.dynamic_rotate %486 by %c2_i32_102 dim 0 : vector<8x128xf32>, i32 -> vector<8x128xf32>
    %493 = vector.broadcast %491 : vector<8x1xf32> to vector<8x128xf32>
    %494 = arith.mulf %493, %492 : vector<8x128xf32>
    %495 = arith.addf %490, %494 : vector<8x128xf32>
    %496 = vector.extract_strided_slice %0 {offsets = [0, 79], sizes = [8, 1], strides = [1, 1]} : vector<8x84xf32> to vector<8x1xf32>
    %c1_i32_103 = arith.constant 1 : i32
    %497 = tpu.dynamic_rotate %486 by %c1_i32_103 dim 0 : vector<8x128xf32>, i32 -> vector<8x128xf32>
    %498 = vector.broadcast %496 : vector<8x1xf32> to vector<8x128xf32>
    %499 = arith.mulf %498, %497 : vector<8x128xf32>
    %500 = arith.addf %495, %499 : vector<8x128xf32>
    %501 = vector.extract_strided_slice %0 {offsets = [0, 80], sizes = [8, 1], strides = [1, 1]} : vector<8x84xf32> to vector<8x1xf32>
    %502 = vector.broadcast %501 : vector<8x1xf32> to vector<8x128xf32>
    %503 = arith.mulf %502, %486 : vector<8x128xf32>
    %504 = arith.addf %500, %503 : vector<8x128xf32>
    %505 = vector.extract_strided_slice %0 {offsets = [0, 81], sizes = [8, 1], strides = [1, 1]} : vector<8x84xf32> to vector<8x1xf32>
    %c7_i32_104 = arith.constant 7 : i32
    %506 = tpu.dynamic_rotate %486 by %c7_i32_104 dim 0 : vector<8x128xf32>, i32 -> vector<8x128xf32>
    %507 = vector.broadcast %505 : vector<8x1xf32> to vector<8x128xf32>
    %508 = arith.mulf %507, %506 : vector<8x128xf32>
    %509 = arith.addf %504, %508 : vector<8x128xf32>
    %510 = vector.extract_strided_slice %0 {offsets = [0, 82], sizes = [8, 1], strides = [1, 1]} : vector<8x84xf32> to vector<8x1xf32>
    %c6_i32_105 = arith.constant 6 : i32
    %511 = tpu.dynamic_rotate %486 by %c6_i32_105 dim 0 : vector<8x128xf32>, i32 -> vector<8x128xf32>
    %512 = vector.broadcast %510 : vector<8x1xf32> to vector<8x128xf32>
    %513 = arith.mulf %512, %511 : vector<8x128xf32>
    %514 = arith.addf %509, %513 : vector<8x128xf32>
    %515 = vector.extract_strided_slice %0 {offsets = [0, 83], sizes = [8, 1], strides = [1, 1]} : vector<8x84xf32> to vector<8x1xf32>
    %c5_i32_106 = arith.constant 5 : i32
    %516 = tpu.dynamic_rotate %486 by %c5_i32_106 dim 0 : vector<8x128xf32>, i32 -> vector<8x128xf32>
    %517 = vector.broadcast %515 : vector<8x1xf32> to vector<8x128xf32>
    %518 = arith.mulf %517, %516 : vector<8x128xf32>
    %519 = arith.addf %514, %518 : vector<8x128xf32>
    %520 = arith.addf %474, %519 : vector<8x128xf32>
    %521 = vector.extract_strided_slice %1 {offsets = [0, 3], sizes = [8, 1], strides = [1, 1]} : vector<8x4xf32> to vector<8x1xf32>
    %522 = vector.broadcast %521 : vector<8x1xf32> to vector<8x128xf32>
    %523 = arith.addf %520, %522 : vector<8x128xf32>
    %cst_107 = arith.constant 0.000000e+00 : f32
    %524 = vector.broadcast %cst_107 : f32 to vector<8x128xf32>
    %525 = arith.subf %524, %523 : vector<8x128xf32>
    %526 = math.exp %525 : vector<8x128xf32>
    %cst_108 = arith.constant 1.000000e+00 : f32
    %527 = vector.broadcast %cst_108 : f32 to vector<8x128xf32>
    %528 = arith.addf %527, %526 : vector<8x128xf32>
    %529 = tpu.reciprocal %528 : vector<8x128xf32> -> vector<8x128xf32>
    %530 = arith.mulf %523, %529 : vector<8x128xf32>
    %531 = arith.addf %530, %134 : vector<8x128xf32>
    %c0_109 = arith.constant 0 : index
    %c0_110 = arith.constant 0 : index
    %532 = vector.load %arg4[%c0_109, %c0_110] : memref<8x128xf32, #tpu.memory_space<vmem>>, vector<8x128xf32>
    tpu.vector_store %arg4[%c0_109, %c0_110], %531 {strides = array<i32>} : memref<8x128xf32, #tpu.memory_space<vmem>>, vector<8x128xf32>,
    return
  }
  func.func @transform_0(%arg0: i32) -> (i32, i32) {
    %c0_i32 = arith.constant 0 : i32
    %c0_i32_0 = arith.constant 0 : i32
    return %arg0, %c0_i32 : i32, i32
  }
  func.func @transform_1(%arg0: i32) -> (i32, i32) {
    %c0_i32 = arith.constant 0 : i32
    %c0_i32_0 = arith.constant 0 : i32
    %c0_i32_1 = arith.constant 0 : i32
    return %c0_i32, %c0_i32_0 : i32, i32
  }
  func.func @transform_2(%arg0: i32) -> (i32, i32) {
    %c0_i32 = arith.constant 0 : i32
    %c0_i32_0 = arith.constant 0 : i32
    %c0_i32_1 = arith.constant 0 : i32
    return %c0_i32, %c0_i32_0 : i32, i32
  }
  func.func @transform_3(%arg0: i32) -> (i32, i32) {
    %c0_i32 = arith.constant 0 : i32
    %c0_i32_0 = arith.constant 0 : i32
    return %arg0, %c0_i32 : i32, i32
  }
}

</mosaic_0001>

<llo_original>
// kernel: transposed_conv_block.1
$region0: #{transposed_conv_block.1}
  #allocation0 [shape = 'u32[]', space=smem, size = 0x4, offset = 0x4, fixed_abs, tag = 'smem constant byte address 0x4 - core index']
  #allocation1 [shape = 'u32[144,128]{1,0:T(1,128)}', space=vmem, size = 0x12000, scoped, tag = 'internal scratch']
  %s0 = inlined_call_operand.vmem [shape: f32[16,64], index: 0, kind: input, shape index: {}]
  %s1 = inlined_call_operand.vmem [shape: f32[8,84], index: 1, kind: input, shape index: {}]
  %s2 = inlined_call_operand.vmem [shape: f32[8,4], index: 2, kind: input, shape index: {}]
  %s3 = inlined_call_operand.hbm [shape: f32[16,128], index: 3, kind: output, shape index: {}]
  %s4 = sld [smem:[#allocation0]]
  $region45: #{transposed_conv_block.1} parent=0
    _
  %s6 = ssub.s32 1, %s4
  %s7 = scalar_select 0, %s6, %s4
  $region1: #{transposed_conv_block.1} parent=0
    #allocation2 [shape = 'u8[8192]{0}', space=vmem, size = 0x2000, scoped, tag = 'output window, operand 0']
    #allocation3 [shape = 's32[2]{0}', space=sflag, size = 0x8, scoped, tag = 'scoped memory for transposed_conv_block.1']
    %8 = vsyncpa [#allocation3], 0
    %s9 = scalar_lea.sflag [#allocation3], 1
    %10 = vsyncpa %s9, 0
    loop: start=0, step=1, limit=4
    $region2: #{transposed_conv_block.1} parent=1 // loop_pre_header
      _
    $region3: #{transposed_conv_block.1} parent=1 // loop_header
      %s12 = sphi 0, %s16
      %p13 = scmp.ge.s32.totalorder %s12, 4
      %s22 = sphi 0, %s24
      %s25 = sphi 0, %s22
      %s26 = sphi 0, %s25
      %s42 = sphi 0, %s26
      %s46 = sphi 0, %s46
      %s48 = sphi 0, %s46
      %s49 = sphi 0, %s48
      %s63 = sphi 0, %s49
      %s67 = sphi 0, %s67
      %s69 = sphi 0, %s67
      %s70 = sphi 0, %s69
      %s84 = sphi 0, %s70
      %s90 = sphi 0, %s92
      %s93 = sphi 0, %s90
      %s94 = sphi 0, %s93
      %s110 = sphi 0, %s94
    $region4: #{transposed_conv_block.1} parent=1 // loop_header_branch
      %15 = sbr.rel (%p13) target = $region8
    $region5: #{transposed_conv_block.1} parent=1 // loop_body
      %s17 = ssub.s32 %s12, 1
      %s18 = ssub.s32 %s12, 2
      %s19 = sadd.s32 %s12, 1
      %s20 = ssub.s32 %s12, %s19
      %p21 = scmp.eq.s32.totalorder %s20, 0
      %s23 = sadd.s32 %s22, 1
      %s24 = scalar_select %p21, %s22, %s23
      %p27 = pneg %p21
      %p28 = scmp.eq.s32.totalorder %s12, 1
      %p29 = por %p27, %p28
      %p30 = scmp.ne.s32.totalorder %s22, %s25
      %p31 = scmp.eq.s32.totalorder %s12, 0
      %p32 = por %p30, %p31
      %p33 = scmp.ne.s32.totalorder %s22, %s25
      %p34 = scmp.eq.s32.totalorder %s17, 1
      %p35 = por %p33, %p34
      %p36 = scmp.ne.s32.totalorder %s25, %s26
      %p37 = scmp.eq.s32.totalorder %s17, 0
      %p38 = por %p36, %p37
      %p39 = scmp.ne.s32.totalorder %s25, %s26
      %p40 = scmp.eq.s32.totalorder %s18, 1
      %p41 = por %p39, %p40
      %p43 = scmp.ne.s32.totalorder %s26, %s42
      %p44 = scmp.eq.s32.totalorder %s18, 0
      %p45 = por %p43, %p44
      %s47 = sadd.s32 %s46, 1
      %p50 = scmp.eq.s32.totalorder %s12, 1
      %p51 = scmp.ne.s32.totalorder %s46, %s48
      %p52 = scmp.eq.s32.totalorder %s12, 0
      %p53 = por %p51, %p52
      %p54 = scmp.ne.s32.totalorder %s46, %s48
      %p55 = scmp.eq.s32.totalorder %s17, 1
      %p56 = por %p54, %p55
      %p57 = scmp.ne.s32.totalorder %s48, %s49
      %p58 = scmp.eq.s32.totalorder %s17, 0
      %p59 = por %p57, %p58
      %p60 = scmp.ne.s32.totalorder %s48, %s49
      %p61 = scmp.eq.s32.totalorder %s18, 1
      %p62 = por %p60, %p61
      %p64 = scmp.ne.s32.totalorder %s49, %s63
      %p65 = scmp.eq.s32.totalorder %s18, 0
      %p66 = por %p64, %p65
      %s68 = sadd.s32 %s67, 1
      %p71 = scmp.eq.s32.totalorder %s12, 1
      %p72 = scmp.ne.s32.totalorder %s67, %s69
      %p73 = scmp.eq.s32.totalorder %s12, 0
      %p74 = por %p72, %p73
      %p75 = scmp.ne.s32.totalorder %s67, %s69
      %p76 = scmp.eq.s32.totalorder %s17, 1
      %p77 = por %p75, %p76
      %p78 = scmp.ne.s32.totalorder %s69, %s70
      %p79 = scmp.eq.s32.totalorder %s17, 0
      %p80 = por %p78, %p79
      %p81 = scmp.ne.s32.totalorder %s69, %s70
      %p82 = scmp.eq.s32.totalorder %s18, 1
      %p83 = por %p81, %p82
      %p85 = scmp.ne.s32.totalorder %s70, %s84
      %p86 = scmp.eq.s32.totalorder %s18, 0
      %p87 = por %p85, %p86
      %s88 = ssub.s32 %s12, %s19
      %p89 = scmp.eq.s32.totalorder %s88, 0
      %s91 = sadd.s32 %s90, 1
      %s92 = scalar_select %p89, %s90, %s91
      %p95 = pneg %p89
      %p96 = scmp.eq.s32.totalorder %s12, 1
      %p97 = por %p95, %p96
      %p98 = scmp.ne.s32.totalorder %s90, %s93
      %p99 = scmp.eq.s32.totalorder %s12, 0
      %p100 = por %p98, %p99
      %p101 = scmp.ne.s32.totalorder %s90, %s93
      %p102 = scmp.eq.s32.totalorder %s17, 1
      %p103 = por %p101, %p102
      %p104 = scmp.ne.s32.totalorder %s93, %s94
      %p105 = scmp.eq.s32.totalorder %s17, 0
      %p106 = por %p104, %p105
      %p107 = scmp.ne.s32.totalorder %s93, %s94
      %p108 = scmp.eq.s32.totalorder %s18, 1
      %p109 = por %p107, %p108
      %p111 = scmp.ne.s32.totalorder %s94, %s110
      %p112 = scmp.eq.s32.totalorder %s18, 0
      %p113 = por %p111, %p112
      %p114 = scmp.le.s32.totalorder 1, %s12
      %p115 = scmp.lt.s32.totalorder %s12, 3
      %p116 = pnand %p114, %p115
      %p117 = pneg %p116
      // Predicated region
      $region9: #{transposed_conv_block.1} parent=5 // pred_check
        _
      $region10: #{transposed_conv_block.1} parent=5 // pred_check_branch
        %119 = sbr.rel (%p116) target = $region12
      $region11: #{transposed_conv_block.1} parent=5 // pred_region
        %s120 = ssub.s32 %s12, 1
        // Predicated region
        $region13: #{transposed_conv_block.1} parent=11 // pred_check
          %p121 = pneg %p59
        $region14: #{transposed_conv_block.1} parent=11 // pred_check_branch
          %123 = sbr.rel (%p121) target = $region16
        $region15: #{transposed_conv_block.1} parent=11 // pred_region
          _
        $region16: #{transposed_conv_block.1} parent=11 // pred_fallthru
          _
        // Predicated region
        $region17: #{transposed_conv_block.1} parent=11 // pred_check
          %p124 = pneg %p80
        $region18: #{transposed_conv_block.1} parent=11 // pred_check_branch
          %126 = sbr.rel (%p124) target = $region20
        $region19: #{transposed_conv_block.1} parent=11 // pred_region
          _
        $region20: #{transposed_conv_block.1} parent=11 // pred_fallthru
          _
      $region12: #{transposed_conv_block.1} parent=5 // pred_fallthru
        _
      %p127 = scmp.lt.s32.totalorder %s12, 2
      // Predicated region
      $region21: #{transposed_conv_block.1} parent=5 // pred_check
        %p128 = pneg %p127
      $region22: #{transposed_conv_block.1} parent=5 // pred_check_branch
        %130 = sbr.rel (%p128) target = $region24
      $region23: #{transposed_conv_block.1} parent=5 // pred_region
        // Predicated region
        $region25: #{transposed_conv_block.1} parent=23 // pred_check
          %p131 = pneg %p32
        $region26: #{transposed_conv_block.1} parent=23 // pred_check_branch
          %133 = sbr.rel (%p131) target = $region28
        $region27: #{transposed_conv_block.1} parent=23 // pred_region
          %p134 = scmp.lt.s32.totalorder %s12, 1
          %s135 = scalar_select %p134, %s12, 1
          %s136 = smul.addr %s135, 8
          %s137 = scalar_lea.vmem %s0, %s136
        $region28: #{transposed_conv_block.1} parent=23 // pred_fallthru
          _
      $region24: #{transposed_conv_block.1} parent=5 // pred_fallthru
        _
      %p138 = scmp.le.s32.totalorder 1, %s12
      %p139 = scmp.lt.s32.totalorder %s12, 3
      %p140 = pnand %p138, %p139
      %p141 = pneg %p140
      // Predicated region
      $region29: #{transposed_conv_block.1} parent=5 // pred_check
        _
      $region30: #{transposed_conv_block.1} parent=5 // pred_check_branch
        %143 = sbr.rel (%p140) target = $region32
      $region31: #{transposed_conv_block.1} parent=5 // pred_region
        %s144 = ssub.s32 %s12, 1
        %p145 = scmp.lt.s32.totalorder %s17, 1
        %s146 = scalar_select %p145, %s17, 1
        %s147 = smul.addr %s146, 8
        %s148 = scalar_lea.vmem %s0, %s147
        %p149 = pneg %p38
        %p150 = pneg %p35
        %p151 = pneg %p59
        %p152 = pneg %p56
        %p153 = pneg %p80
        %p154 = pneg %p77
        %p155 = pneg %p106
        %p156 = pneg %p103
        %s157 = sand.u32 %s93, 1
        %s158 = scalar_lea.sflag [#allocation3], %s157
        %s159 = sand.u32 %s93, 1
        %s160 = smul.addr %s159, 8
        %s161 = scalar_lea.vmem [#allocation2], %s160
        %p162 = scmp.lt.s32.totalorder %s17, 1
        %s163 = scalar_select %p162, %s17, 1
        %s164 = smul.addr %s163, 8
        %s165 = scalar_lea.vmem %s0, %s164
        %v166 = vld [vmem:[%s1] sm:$0xff]
        %v167 = vld [vmem:[%s2] sm:$0xff]
        %v168 = vld [vmem:[%s165] sm:$0xff]
        %v169 = vlaneseq
        %v170 = vand.u32 %v169, 127
        %v171 = vand.u32 %v170, 1
        %vm172 = vcmp.eq.s32.totalorder %v171, 0
        %v173 = vlaneseq
        %v174 = vshrl.u32 %v173, 7
        %v175 = vadd.s32 %v174, 8
        %v176 = vadd.s32 %v174, 16
        %v177 = vadd.s32 %v174, 24
        %v178 = vadd.s32 %v174, 32
        %v179 = vadd.s32 %v174, 40
        %v180 = vadd.s32 %v174, 48
        %v181 = vadd.s32 %v174, 56
        %v182 = vadd.s32 %v174, %v174
        %v183 = vadd.s32 %v175, %v175
        %v184 = vadd.s32 %v176, %v176
        %v185 = vadd.s32 %v177, %v177
        %v186 = vadd.s32 %v178, %v178
        %v187 = vadd.s32 %v179, %v179
        %v188 = vadd.s32 %v180, %v180
        %v189 = vadd.s32 %v181, %v181
        %vm190 = vcmp.eq.s32.totalorder %v170, %v182
        %vm191 = vcmp.eq.s32.totalorder %v170, %v183
        %vm192 = vcmp.eq.s32.totalorder %v170, %v184
        %vm193 = vcmp.eq.s32.totalorder %v170, %v185
        %vm194 = vcmp.eq.s32.totalorder %v170, %v186
        %vm195 = vcmp.eq.s32.totalorder %v170, %v187
        %vm196 = vcmp.eq.s32.totalorder %v170, %v188
        %vm197 = vcmp.eq.s32.totalorder %v170, %v189
        %v198 = vadd.s32 %v182, 1
        %v199 = vadd.s32 %v183, 1
        %v200 = vadd.s32 %v184, 1
        %v201 = vadd.s32 %v185, 1
        %v202 = vadd.s32 %v186, 1
        %v203 = vadd.s32 %v187, 1
        %v204 = vadd.s32 %v188, 1
        %v205 = vadd.s32 %v189, 1
        %vm206 = vcmp.eq.s32.totalorder %v170, %v198
        %vm207 = vcmp.eq.s32.totalorder %v170, %v199
        %vm208 = vcmp.eq.s32.totalorder %v170, %v200
        %vm209 = vcmp.eq.s32.totalorder %v170, %v201
        %vm210 = vcmp.eq.s32.totalorder %v170, %v202
        %vm211 = vcmp.eq.s32.totalorder %v170, %v203
        %vm212 = vcmp.eq.s32.totalorder %v170, %v204
        %vm213 = vcmp.eq.s32.totalorder %v170, %v205
        %vm214 = vmor %vm190, %vm206
        %vm215 = vmor %vm191, %vm207
        %vm216 = vmor %vm192, %vm208
        %vm217 = vmor %vm193, %vm209
        %vm218 = vmor %vm194, %vm210
        %vm219 = vmor %vm195, %vm211
        %vm220 = vmor %vm196, %vm212
        %vm221 = vmor %vm197, %vm213
        %v222 = vsel %vm214, 1, 0
        %v223 = vsel %vm215, 1, 0
        %v224 = vsel %vm216, 1, 0
        %v225 = vsel %vm217, 1, 0
        %v226 = vsel %vm218, 1, 0
        %v227 = vsel %vm219, 1, 0
        %v228 = vsel %vm220, 1, 0
        %v229 = vsel %vm221, 1, 0
        %v230 = vcvt.s32.f32 %v222
        %v231 = vcvt.s32.f32 %v223
        %v232 = vcvt.s32.f32 %v224
        %v233 = vcvt.s32.f32 %v225
        %v234 = vcvt.s32.f32 %v226
        %v235 = vcvt.s32.f32 %v227
        %v236 = vcvt.s32.f32 %v228
        %v237 = vcvt.s32.f32 %v229
        %vm238 = vcmask 523264
        %v240 = vsel %vm238, %v168, 0
        %242 = vmatprep.subr.mxu0 0.0
        %v243 = vand.u32 %v230, 4294901760
        %244 = vmatpush1.msra.mxu0 %v243
        %245 = vmatprep.subr.mxu0 0.0
        %v246 = vand.u32 %v231, 4294901760
        %247 = vmatpush1.msra.mxu0 %v246
        %248 = vmatprep.subr.mxu0 0.0
        %v249 = vand.u32 %v232, 4294901760
        %250 = vmatpush1.msra.mxu0 %v249
        %251 = vmatprep.subr.mxu0 0.0
        %v252 = vand.u32 %v233, 4294901760
        %253 = vmatpush1.msra.mxu0 %v252
        %254 = vmatprep.subr.mxu0 0.0
        %v255 = vand.u32 %v234, 4294901760
        %256 = vmatpush1.msra.mxu0 %v255
        %257 = vmatprep.subr.mxu0 0.0
        %v258 = vand.u32 %v235, 4294901760
        %259 = vmatpush1.msra.mxu0 %v258
        %260 = vmatprep.subr.mxu0 0.0
        %v261 = vand.u32 %v236, 4294901760
        %262 = vmatpush1.msra.mxu0 %v261
        %263 = vmatprep.subr.mxu0 0.0
        %v264 = vand.u32 %v237, 4294901760
        %265 = vmatpush1.msra.mxu0 %v264
        %266 = vmatprep.subr.mxu0 0.0
        %267 = vmatpush1.msra.mxu0 0.0
        %268 = vmatprep.subr.mxu0 0.0
        %269 = vmatpush1.msra.mxu0 0.0
        %270 = vmatprep.subr.mxu0 0.0
        %271 = vmatpush1.msra.mxu0 0.0
        %272 = vmatprep.subr.mxu0 0.0
        %273 = vmatpush1.msra.mxu0 0.0
        %274 = vmatprep.subr.mxu0 0.0
        %275 = vmatpush1.msra.mxu0 0.0
        %276 = vmatprep.subr.mxu0 0.0
        %277 = vmatpush1.msra.mxu0 0.0
        %278 = vmatprep.subr.mxu0 0.0
        %279 = vmatpush1.msra.mxu0 0.0
        %280 = vmatprep.subr.mxu0 0.0
        %281 = vmatpush1.msra.mxu0 0.0
        %282 = vmatprep.subr.mxu0 0.0
        %283 = vmatpush1.msra.mxu0 0.0
        %284 = vmatprep.subr.mxu0 0.0
        %285 = vmatpush1.msra.mxu0 0.0
        %286 = vmatprep.subr.mxu0 0.0
        %287 = vmatpush1.msra.mxu0 0.0
        %288 = vmatprep.subr.mxu0 0.0
        %289 = vmatpush1.msra.mxu0 0.0
        %290 = vmatprep.subr.mxu0 0.0
        %291 = vmatpush1.msra.mxu0 0.0
        %292 = vmatprep.subr.mxu0 0.0
        %293 = vmatpush1.msra.mxu0 0.0
        %294 = vmatprep.subr.mxu0 0.0
        %295 = vmatpush1.msra.mxu0 0.0
        %296 = vmatprep.subr.mxu0 0.0
        %297 = vmatpush1.msra.mxu0 0.0
        %298 = vmatprep.subr.mxu0 0.0
        %299 = vmatpush1.msra.mxu0 0.0
        %300 = vmatprep.subr.mxu0 0.0
        %301 = vmatpush1.msra.mxu0 0.0
        %302 = vmatprep.subr.mxu0 0.0
        %303 = vmatpush1.msra.mxu0 0.0
        %304 = vmatprep.subr.mxu0 0.0
        %305 = vmatpush1.msra.mxu0 0.0
        %306 = vmatprep.subr.mxu0 0.0
        %307 = vmatpush1.msra.mxu0 0.0
        %308 = vmatprep.subr.mxu0 0.0
        %309 = vmatpush1.msra.mxu0 0.0
        %310 = vmatprep.subr.mxu0 0.0
        %311 = vmatpush1.msra.mxu0 0.0
        %312 = vmatprep.subr.mxu0 0.0
        %313 = vmatpush1.msra.mxu0 0.0
        %314 = vmatprep.mubr.f32.mxu0 0.0
        %v315 = vand.u32 %v240, 4294901760
        %v316 = vsub.f32 %v240, %v315
        %v317 = vand.u32 %v316, 4294901760
        %v318 = vsub.f32 %v316, %v317
        %v319 = vand.u32 %v318, 4294901760
        %320 = vmatmul.mubr.f32.gmra.mrb[0].mxu0 %v319
        %v321 = vpop.f32.mrb[0].mxu0
        %v322 = vadd.f32 0.0, %v321
        %v323 = vpop.f32.mrb[0].mxu0
        %324 = vdwg.mxu0
        %325 = vmatprep.subr.mxu0 0.0
        %v326 = vand.u32 %v230, 4294901760
        %v327 = vsub.f32 %v230, %v326
        %v328 = vand.u32 %v327, 4294901760
        %v329 = vsub.f32 %v327, %v328
        %v330 = vand.u32 %v329, 4294901760
        %331 = vmatpush1.msra.mxu0 %v330
        %332 = vmatprep.subr.mxu0 0.0
        %v333 = vand.u32 %v231, 4294901760
        %v334 = vsub.f32 %v231, %v333
        %v335 = vand.u32 %v334, 4294901760
        %v336 = vsub.f32 %v334, %v335
        %v337 = vand.u32 %v336, 4294901760
        %338 = vmatpush1.msra.mxu0 %v337
        %339 = vmatprep.subr.mxu0 0.0
        %v340 = vand.u32 %v232, 4294901760
        %v341 = vsub.f32 %v232, %v340
        %v342 = vand.u32 %v341, 4294901760
        %v343 = vsub.f32 %v341, %v342
        %v344 = vand.u32 %v343, 4294901760
        %345 = vmatpush1.msra.mxu0 %v344
        %346 = vmatprep.subr.mxu0 0.0
        %v347 = vand.u32 %v233, 4294901760
        %v348 = vsub.f32 %v233, %v347
        %v349 = vand.u32 %v348, 4294901760
        %v350 = vsub.f32 %v348, %v349
        %v351 = vand.u32 %v350, 4294901760
        %352 = vmatpush1.msra.mxu0 %v351
        %353 = vmatprep.subr.mxu0 0.0
        %v354 = vand.u32 %v234, 4294901760
        %v355 = vsub.f32 %v234, %v354
        %v356 = vand.u32 %v355, 4294901760
        %v357 = vsub.f32 %v355, %v356
        %v358 = vand.u32 %v357, 4294901760
        %359 = vmatpush1.msra.mxu0 %v358
        %360 = vmatprep.subr.mxu0 0.0
        %v361 = vand.u32 %v235, 4294901760
        %v362 = vsub.f32 %v235, %v361
        %v363 = vand.u32 %v362, 4294901760
        %v364 = vsub.f32 %v362, %v363
        %v365 = vand.u32 %v364, 4294901760
        %366 = vmatpush1.msra.mxu0 %v365
        %367 = vmatprep.subr.mxu0 0.0
        %v368 = vand.u32 %v236, 4294901760
        %v369 = vsub.f32 %v236, %v368
        %v370 = vand.u32 %v369, 4294901760
        %v371 = vsub.f32 %v369, %v370
        %v372 = vand.u32 %v371, 4294901760
        %373 = vmatpush1.msra.mxu0 %v372
        %374 = vmatprep.subr.mxu0 0.0
        %v375 = vand.u32 %v237, 4294901760
        %v376 = vsub.f32 %v237, %v375
        %v377 = vand.u32 %v376, 4294901760
        %v378 = vsub.f32 %v376, %v377
        %v379 = vand.u32 %v378, 4294901760
        %380 = vmatpush1.msra.mxu0 %v379
        %381 = vmatprep.subr.mxu0 0.0
        %382 = vmatpush1.msra.mxu0 0.0
        %383 = vmatprep.subr.mxu0 0.0
        %384 = vmatpush1.msra.mxu0 0.0
        %385 = vmatprep.subr.mxu0 0.0
        %386 = vmatpush1.msra.mxu0 0.0
        %387 = vmatprep.subr.mxu0 0.0
        %388 = vmatpush1.msra.mxu0 0.0
        %389 = vmatprep.subr.mxu0 0.0
        %390 = vmatpush1.msra.mxu0 0.0
        %391 = vmatprep.subr.mxu0 0.0
        %392 = vmatpush1.msra.mxu0 0.0
        %393 = vmatprep.subr.mxu0 0.0
        %394 = vmatpush1.msra.mxu0 0.0
        %395 = vmatprep.subr.mxu0 0.0
        %396 = vmatpush1.msra.mxu0 0.0
        %397 = vmatprep.subr.mxu0 0.0
        %398 = vmatpush1.msra.mxu0 0.0
        %399 = vmatprep.subr.mxu0 0.0
        %400 = vmatpush1.msra.mxu0 0.0
        %401 = vmatprep.subr.mxu0 0.0
        %402 = vmatpush1.msra.mxu0 0.0
        %403 = vmatprep.subr.mxu0 0.0
        %404 = vmatpush1.msra.mxu0 0.0
        %405 = vmatprep.subr.mxu0 0.0
        %406 = vmatpush1.msra.mxu0 0.0
        %407 = vmatprep.subr.mxu0 0.0
        %408 = vmatpush1.msra.mxu0 0.0
        %409 = vmatprep.subr.mxu0 0.0
        %410 = vmatpush1.msra.mxu0 0.0
        %411 = vmatprep.subr.mxu0 0.0
        %412 = vmatpush1.msra.mxu0 0.0
        %413 = vmatprep.subr.mxu0 0.0
        %414 = vmatpush1.msra.mxu0 0.0
        %415 = vmatprep.subr.mxu0 0.0
        %416 = vmatpush1.msra.mxu0 0.0
        %417 = vmatprep.subr.mxu0 0.0
        %418 = vmatpush1.msra.mxu0 0.0
        %419 = vmatprep.subr.mxu0 0.0
        %420 = vmatpush1.msra.mxu0 0.0
        %421 = vmatprep.subr.mxu0 0.0
        %422 = vmatpush1.msra.mxu0 0.0
        %423 = vmatprep.subr.mxu0 0.0
        %424 = vmatpush1.msra.mxu0 0.0
        %425 = vmatprep.subr.mxu0 0.0
        %426 = vmatpush1.msra.mxu0 0.0
        %427 = vmatprep.subr.mxu0 0.0
        %428 = vmatpush1.msra.mxu0 0.0
        %429 = vmatprep.mubr.f32.mxu0 0.0
        %v430 = vand.u32 %v240, 4294901760
        %431 = vmatmul.mubr.f32.gmra.mrb[0].mxu0 %v430
        %v432 = vpop.f32.mrb[0].mxu0
        %v433 = vadd.f32 %v322, %v432
        %v434 = vpop.f32.mrb[0].mxu0
        %435 = vdwg.mxu0
        %436 = vmatprep.subr.mxu0 0.0
        %v437 = vand.u32 %v230, 4294901760
        %v438 = vsub.f32 %v230, %v437
        %439 = vmatpush1.msra.mxu0 %v438
        %440 = vmatprep.subr.mxu0 0.0
        %v441 = vand.u32 %v231, 4294901760
        %v442 = vsub.f32 %v231, %v441
        %443 = vmatpush1.msra.mxu0 %v442
        %444 = vmatprep.subr.mxu0 0.0
        %v445 = vand.u32 %v232, 4294901760
        %v446 = vsub.f32 %v232, %v445
        %447 = vmatpush1.msra.mxu0 %v446
        %448 = vmatprep.subr.mxu0 0.0
        %v449 = vand.u32 %v233, 4294901760
        %v450 = vsub.f32 %v233, %v449
        %451 = vmatpush1.msra.mxu0 %v450
        %452 = vmatprep.subr.mxu0 0.0
        %v453 = vand.u32 %v234, 4294901760
        %v454 = vsub.f32 %v234, %v453
        %455 = vmatpush1.msra.mxu0 %v454
        %456 = vmatprep.subr.mxu0 0.0
        %v457 = vand.u32 %v235, 4294901760
        %v458 = vsub.f32 %v235, %v457
        %459 = vmatpush1.msra.mxu0 %v458
        %460 = vmatprep.subr.mxu0 0.0
        %v461 = vand.u32 %v236, 4294901760
        %v462 = vsub.f32 %v236, %v461
        %463 = vmatpush1.msra.mxu0 %v462
        %464 = vmatprep.subr.mxu0 0.0
        %v465 = vand.u32 %v237, 4294901760
        %v466 = vsub.f32 %v237, %v465
        %467 = vmatpush1.msra.mxu0 %v466
        %468 = vmatprep.subr.mxu0 0.0
        %469 = vmatpush1.msra.mxu0 0.0
        %470 = vmatprep.subr.mxu0 0.0
        %471 = vmatpush1.msra.mxu0 0.0
        %472 = vmatprep.subr.mxu0 0.0
        %473 = vmatpush1.msra.mxu0 0.0
        %474 = vmatprep.subr.mxu0 0.0
        %475 = vmatpush1.msra.mxu0 0.0
        %476 = vmatprep.subr.mxu0 0.0
        %477 = vmatpush1.msra.mxu0 0.0
        %478 = vmatprep.subr.mxu0 0.0
        %479 = vmatpush1.msra.mxu0 0.0
        %480 = vmatprep.subr.mxu0 0.0
        %481 = vmatpush1.msra.mxu0 0.0
        %482 = vmatprep.subr.mxu0 0.0
        %483 = vmatpush1.msra.mxu0 0.0
        %484 = vmatprep.subr.mxu0 0.0
        %485 = vmatpush1.msra.mxu0 0.0
        %486 = vmatprep.subr.mxu0 0.0
        %487 = vmatpush1.msra.mxu0 0.0
        %488 = vmatprep.subr.mxu0 0.0
        %489 = vmatpush1.msra.mxu0 0.0
        %490 = vmatprep.subr.mxu0 0.0
        %491 = vmatpush1.msra.mxu0 0.0
        %492 = vmatprep.subr.mxu0 0.0
        %493 = vmatpush1.msra.mxu0 0.0
        %494 = vmatprep.subr.mxu0 0.0
        %495 = vmatpush1.msra.mxu0 0.0
        %496 = vmatprep.subr.mxu0 0.0
        %497 = vmatpush1.msra.mxu0 0.0
        %498 = vmatprep.subr.mxu0 0.0
        %499 = vmatpush1.msra.mxu0 0.0
        %500 = vmatprep.subr.mxu0 0.0
        %501 = vmatpush1.msra.mxu0 0.0
        %502 = vmatprep.subr.mxu0 0.0
        %503 = vmatpush1.msra.mxu0 0.0
        %504 = vmatprep.subr.mxu0 0.0
        %505 = vmatpush1.msra.mxu0 0.0
        %506 = vmatprep.subr.mxu0 0.0
        %507 = vmatpush1.msra.mxu0 0.0
        %508 = vmatprep.subr.mxu0 0.0
        %509 = vmatpush1.msra.mxu0 0.0
        %510 = vmatprep.subr.mxu0 0.0
        %511 = vmatpush1.msra.mxu0 0.0
        %512 = vmatprep.subr.mxu0 0.0
        %513 = vmatpush1.msra.mxu0 0.0
        %514 = vmatprep.subr.mxu0 0.0
        %515 = vmatpush1.msra.mxu0 0.0
        %516 = vmatprep.mubr.f32.mxu0 0.0
        %v517 = vand.u32 %v240, 4294901760
        %v518 = vsub.f32 %v240, %v517
        %519 = vmatmul.mubr.f32.gmra.mrb[0].mxu0 %v518
        %v520 = vpop.f32.mrb[0].mxu0
        %v521 = vadd.f32 %v433, %v520
        %v522 = vpop.f32.mrb[0].mxu0
        %523 = vdwg.mxu0
        %524 = vmatprep.subr.mxu0 0.0
        %v525 = vand.u32 %v230, 4294901760
        %526 = vmatpush1.msra.mxu0 %v525
        %527 = vmatprep.subr.mxu0 0.0
        %v528 = vand.u32 %v231, 4294901760
        %529 = vmatpush1.msra.mxu0 %v528
        %530 = vmatprep.subr.mxu0 0.0
        %v531 = vand.u32 %v232, 4294901760
        %532 = vmatpush1.msra.mxu0 %v531
        %533 = vmatprep.subr.mxu0 0.0
        %v534 = vand.u32 %v233, 4294901760
        %535 = vmatpush1.msra.mxu0 %v534
        %536 = vmatprep.subr.mxu0 0.0
        %v537 = vand.u32 %v234, 4294901760
        %538 = vmatpush1.msra.mxu0 %v537
        %539 = vmatprep.subr.mxu0 0.0
        %v540 = vand.u32 %v235, 4294901760
        %541 = vmatpush1.msra.mxu0 %v540
        %542 = vmatprep.subr.mxu0 0.0
        %v543 = vand.u32 %v236, 4294901760
        %544 = vmatpush1.msra.mxu0 %v543
        %545 = vmatprep.subr.mxu0 0.0
        %v546 = vand.u32 %v237, 4294901760
        %547 = vmatpush1.msra.mxu0 %v546
        %548 = vmatprep.subr.mxu0 0.0
        %549 = vmatpush1.msra.mxu0 0.0
        %550 = vmatprep.subr.mxu0 0.0
        %551 = vmatpush1.msra.mxu0 0.0
        %552 = vmatprep.subr.mxu0 0.0
        %553 = vmatpush1.msra.mxu0 0.0
        %554 = vmatprep.subr.mxu0 0.0
        %555 = vmatpush1.msra.mxu0 0.0
        %556 = vmatprep.subr.mxu0 0.0
        %557 = vmatpush1.msra.mxu0 0.0
        %558 = vmatprep.subr.mxu0 0.0
        %559 = vmatpush1.msra.mxu0 0.0
        %560 = vmatprep.subr.mxu0 0.0
        %561 = vmatpush1.msra.mxu0 0.0
        %562 = vmatprep.subr.mxu0 0.0
        %563 = vmatpush1.msra.mxu0 0.0
        %564 = vmatprep.subr.mxu0 0.0
        %565 = vmatpush1.msra.mxu0 0.0
        %566 = vmatprep.subr.mxu0 0.0
        %567 = vmatpush1.msra.mxu0 0.0
        %568 = vmatprep.subr.mxu0 0.0
        %569 = vmatpush1.msra.mxu0 0.0
        %570 = vmatprep.subr.mxu0 0.0
        %571 = vmatpush1.msra.mxu0 0.0
        %572 = vmatprep.subr.mxu0 0.0
        %573 = vmatpush1.msra.mxu0 0.0
        %574 = vmatprep.subr.mxu0 0.0
        %575 = vmatpush1.msra.mxu0 0.0
        %576 = vmatprep.subr.mxu0 0.0
        %577 = vmatpush1.msra.mxu0 0.0
        %578 = vmatprep.subr.mxu0 0.0
        %579 = vmatpush1.msra.mxu0 0.0
        %580 = vmatprep.subr.mxu0 0.0
        %581 = vmatpush1.msra.mxu0 0.0
        %582 = vmatprep.subr.mxu0 0.0
        %583 = vmatpush1.msra.mxu0 0.0
        %584 = vmatprep.subr.mxu0 0.0
        %585 = vmatpush1.msra.mxu0 0.0
        %586 = vmatprep.subr.mxu0 0.0
        %587 = vmatpush1.msra.mxu0 0.0
        %588 = vmatprep.subr.mxu0 0.0
        %589 = vmatpush1.msra.mxu0 0.0
        %590 = vmatprep.subr.mxu0 0.0
        %591 = vmatpush1.msra.mxu0 0.0
        %592 = vmatprep.subr.mxu0 0.0
        %593 = vmatpush1.msra.mxu0 0.0
        %594 = vmatprep.subr.mxu0 0.0
        %595 = vmatpush1.msra.mxu0 0.0
        %596 = vmatprep.mubr.f32.mxu0 0.0
        %v597 = vand.u32 %v240, 4294901760
        %v598 = vsub.f32 %v240, %v597
        %v599 = vand.u32 %v598, 4294901760
        %600 = vmatmul.mubr.f32.gmra.mrb[0].mxu0 %v599
        %v601 = vpop.f32.mrb[0].mxu0
        %v602 = vadd.f32 %v521, %v601
        %v603 = vpop.f32.mrb[0].mxu0
        %604 = vdwg.mxu0
        %605 = vmatprep.subr.mxu0 0.0
        %v606 = vand.u32 %v230, 4294901760
        %v607 = vsub.f32 %v230, %v606
        %v608 = vand.u32 %v607, 4294901760
        %609 = vmatpush1.msra.mxu0 %v608
        %610 = vmatprep.subr.mxu0 0.0
        %v611 = vand.u32 %v231, 4294901760
        %v612 = vsub.f32 %v231, %v611
        %v613 = vand.u32 %v612, 4294901760
        %614 = vmatpush1.msra.mxu0 %v613
        %615 = vmatprep.subr.mxu0 0.0
        %v616 = vand.u32 %v232, 4294901760
        %v617 = vsub.f32 %v232, %v616
        %v618 = vand.u32 %v617, 4294901760
        %619 = vmatpush1.msra.mxu0 %v618
        %620 = vmatprep.subr.mxu0 0.0
        %v621 = vand.u32 %v233, 4294901760
        %v622 = vsub.f32 %v233, %v621
        %v623 = vand.u32 %v622, 4294901760
        %624 = vmatpush1.msra.mxu0 %v623
        %625 = vmatprep.subr.mxu0 0.0
        %v626 = vand.u32 %v234, 4294901760
        %v627 = vsub.f32 %v234, %v626
        %v628 = vand.u32 %v627, 4294901760
        %629 = vmatpush1.msra.mxu0 %v628
        %630 = vmatprep.subr.mxu0 0.0
        %v631 = vand.u32 %v235, 4294901760
        %v632 = vsub.f32 %v235, %v631
        %v633 = vand.u32 %v632, 4294901760
        %634 = vmatpush1.msra.mxu0 %v633
        %635 = vmatprep.subr.mxu0 0.0
        %v636 = vand.u32 %v236, 4294901760
        %v637 = vsub.f32 %v236, %v636
        %v638 = vand.u32 %v637, 4294901760
        %639 = vmatpush1.msra.mxu0 %v638
        %640 = vmatprep.subr.mxu0 0.0
        %v641 = vand.u32 %v237, 4294901760
        %v642 = vsub.f32 %v237, %v641
        %v643 = vand.u32 %v642, 4294901760
        %644 = vmatpush1.msra.mxu0 %v643
        %645 = vmatprep.subr.mxu0 0.0
        %646 = vmatpush1.msra.mxu0 0.0
        %647 = vmatprep.subr.mxu0 0.0
        %648 = vmatpush1.msra.mxu0 0.0
        %649 = vmatprep.subr.mxu0 0.0
        %650 = vmatpush1.msra.mxu0 0.0
        %651 = vmatprep.subr.mxu0 0.0
        %652 = vmatpush1.msra.mxu0 0.0
        %653 = vmatprep.subr.mxu0 0.0
        %654 = vmatpush1.msra.mxu0 0.0
        %655 = vmatprep.subr.mxu0 0.0
        %656 = vmatpush1.msra.mxu0 0.0
        %657 = vmatprep.subr.mxu0 0.0
        %658 = vmatpush1.msra.mxu0 0.0
        %659 = vmatprep.subr.mxu0 0.0
        %660 = vmatpush1.msra.mxu0 0.0
        %661 = vmatprep.subr.mxu0 0.0
        %662 = vmatpush1.msra.mxu0 0.0
        %663 = vmatprep.subr.mxu0 0.0
        %664 = vmatpush1.msra.mxu0 0.0
        %665 = vmatprep.subr.mxu0 0.0
        %666 = vmatpush1.msra.mxu0 0.0
        %667 = vmatprep.subr.mxu0 0.0
        %668 = vmatpush1.msra.mxu0 0.0
        %669 = vmatprep.subr.mxu0 0.0
        %670 = vmatpush1.msra.mxu0 0.0
        %671 = vmatprep.subr.mxu0 0.0
        %672 = vmatpush1.msra.mxu0 0.0
        %673 = vmatprep.subr.mxu0 0.0
        %674 = vmatpush1.msra.mxu0 0.0
        %675 = vmatprep.subr.mxu0 0.0
        %676 = vmatpush1.msra.mxu0 0.0
        %677 = vmatprep.subr.mxu0 0.0
        %678 = vmatpush1.msra.mxu0 0.0
        %679 = vmatprep.subr.mxu0 0.0
        %680 = vmatpush1.msra.mxu0 0.0
        %681 = vmatprep.subr.mxu0 0.0
        %682 = vmatpush1.msra.mxu0 0.0
        %683 = vmatprep.subr.mxu0 0.0
        %684 = vmatpush1.msra.mxu0 0.0
        %685 = vmatprep.subr.mxu0 0.0
        %686 = vmatpush1.msra.mxu0 0.0
        %687 = vmatprep.subr.mxu0 0.0
        %688 = vmatpush1.msra.mxu0 0.0
        %689 = vmatprep.subr.mxu0 0.0
        %690 = vmatpush1.msra.mxu0 0.0
        %691 = vmatprep.subr.mxu0 0.0
        %692 = vmatpush1.msra.mxu0 0.0
        %693 = vmatprep.mubr.f32.mxu0 0.0
        %v694 = vand.u32 %v240, 4294901760
        %695 = vmatmul.mubr.f32.gmra.mrb[0].mxu0 %v694
        %v696 = vpop.f32.mrb[0].mxu0
        %v697 = vadd.f32 %v602, %v696
        %v698 = vpop.f32.mrb[0].mxu0
        %699 = vdwg.mxu0
        %700 = vmatprep.subr.mxu0 0.0
        %v701 = vand.u32 %v230, 4294901760
        %702 = vmatpush1.msra.mxu0 %v701
        %703 = vmatprep.subr.mxu0 0.0
        %v704 = vand.u32 %v231, 4294901760
        %705 = vmatpush1.msra.mxu0 %v704
        %706 = vmatprep.subr.mxu0 0.0
        %v707 = vand.u32 %v232, 4294901760
        %708 = vmatpush1.msra.mxu0 %v707
        %709 = vmatprep.subr.mxu0 0.0
        %v710 = vand.u32 %v233, 4294901760
        %711 = vmatpush1.msra.mxu0 %v710
        %712 = vmatprep.subr.mxu0 0.0
        %v713 = vand.u32 %v234, 4294901760
        %714 = vmatpush1.msra.mxu0 %v713
        %715 = vmatprep.subr.mxu0 0.0
        %v716 = vand.u32 %v235, 4294901760
        %717 = vmatpush1.msra.mxu0 %v716
        %718 = vmatprep.subr.mxu0 0.0
        %v719 = vand.u32 %v236, 4294901760
        %720 = vmatpush1.msra.mxu0 %v719
        %721 = vmatprep.subr.mxu0 0.0
        %v722 = vand.u32 %v237, 4294901760
        %723 = vmatpush1.msra.mxu0 %v722
        %724 = vmatprep.subr.mxu0 0.0
        %725 = vmatpush1.msra.mxu0 0.0
        %726 = vmatprep.subr.mxu0 0.0
        %727 = vmatpush1.msra.mxu0 0.0
        %728 = vmatprep.subr.mxu0 0.0
        %729 = vmatpush1.msra.mxu0 0.0
        %730 = vmatprep.subr.mxu0 0.0
        %731 = vmatpush1.msra.mxu0 0.0
        %732 = vmatprep.subr.mxu0 0.0
        %733 = vmatpush1.msra.mxu0 0.0
        %734 = vmatprep.subr.mxu0 0.0
        %735 = vmatpush1.msra.mxu0 0.0
        %736 = vmatprep.subr.mxu0 0.0
        %737 = vmatpush1.msra.mxu0 0.0
        %738 = vmatprep.subr.mxu0 0.0
        %739 = vmatpush1.msra.mxu0 0.0
        %740 = vmatprep.subr.mxu0 0.0
        %741 = vmatpush1.msra.mxu0 0.0
        %742 = vmatprep.subr.mxu0 0.0
        %743 = vmatpush1.msra.mxu0 0.0
        %744 = vmatprep.subr.mxu0 0.0
        %745 = vmatpush1.msra.mxu0 0.0
        %746 = vmatprep.subr.mxu0 0.0
        %747 = vmatpush1.msra.mxu0 0.0
        %748 = vmatprep.subr.mxu0 0.0
        %749 = vmatpush1.msra.mxu0 0.0
        %750 = vmatprep.subr.mxu0 0.0
        %751 = vmatpush1.msra.mxu0 0.0
        %752 = vmatprep.subr.mxu0 0.0
        %753 = vmatpush1.msra.mxu0 0.0
        %754 = vmatprep.subr.mxu0 0.0
        %755 = vmatpush1.msra.mxu0 0.0
        %756 = vmatprep.subr.mxu0 0.0
        %757 = vmatpush1.msra.mxu0 0.0
        %758 = vmatprep.subr.mxu0 0.0
        %759 = vmatpush1.msra.mxu0 0.0
        %760 = vmatprep.subr.mxu0 0.0
        %761 = vmatpush1.msra.mxu0 0.0
        %762 = vmatprep.subr.mxu0 0.0
        %763 = vmatpush1.msra.mxu0 0.0
        %764 = vmatprep.subr.mxu0 0.0
        %765 = vmatpush1.msra.mxu0 0.0
        %766 = vmatprep.subr.mxu0 0.0
        %767 = vmatpush1.msra.mxu0 0.0
        %768 = vmatprep.subr.mxu0 0.0
        %769 = vmatpush1.msra.mxu0 0.0
        %770 = vmatprep.subr.mxu0 0.0
        %771 = vmatpush1.msra.mxu0 0.0
        %772 = vmatprep.mubr.f32.mxu0 0.0
        %v773 = vand.u32 %v240, 4294901760
        %774 = vmatmul.mubr.f32.gmra.mrb[0].mxu0 %v773
        %v775 = vpop.f32.mrb[0].mxu0
        %v776 = vadd.f32 %v697, %v775
        %v777 = vpop.f32.mrb[0].mxu0
        %778 = vdwg.mxu0
        %779 = vrot.lane.b32.xlu0 %v776, 126
        %v780 = vpop.permute.xlu0 %779
        %v781 = vadd.s32 %v170, 2
        %vm782 = vcmp.ge.s32.totalorder %v781, 0
        %vm783 = vcmp.lt.s32.totalorder %v781, 128
        %vm784 = vmand %vm782, %vm783
        %v785 = vsel %vm784, %v780, 0.0
        %v786 = vrot.slane %v776, 5
        %788 = vset.pattern.permute.xlu0 7
        %789 = vperm.xlu0 %788, %v166
        %v790 = vpop.permute.xlu0 %789
        %v792 = vmul.f32 %v790, %v786
        %v793 = vrot.slane %v776, 6
        %794 = vset.pattern.permute.xlu0 8
        %795 = vperm.xlu0 %794, %v166
        %v796 = vpop.permute.xlu0 %795
        %v798 = vmul.f32 %v796, %v793
        %v799 = vadd.f32 %v792, %v798
        %v800 = vrot.slane %v776, 7
        %801 = vset.pattern.permute.xlu0 9
        %802 = vperm.xlu0 %801, %v166
        %v803 = vpop.permute.xlu0 %802
        %v805 = vmul.f32 %v803, %v800
        %v806 = vadd.f32 %v799, %v805
        %807 = vset.pattern.permute.xlu0 10
        %808 = vperm.xlu0 %807, %v166
        %v809 = vpop.permute.xlu0 %808
        %v811 = vmul.f32 %v809, %v776
        %v812 = vadd.f32 %v806, %v811
        %v813 = vrot.slane %v776, 1
        %814 = vset.pattern.permute.xlu0 11
        %815 = vperm.xlu0 %814, %v166
        %v816 = vpop.permute.xlu0 %815
        %v818 = vmul.f32 %v816, %v813
        %v819 = vadd.f32 %v812, %v818
        %v820 = vrot.slane %v776, 2
        %821 = vset.pattern.permute.xlu0 12
        %822 = vperm.xlu0 %821, %v166
        %v823 = vpop.permute.xlu0 %822
        %v825 = vmul.f32 %v823, %v820
        %v826 = vadd.f32 %v819, %v825
        %v827 = vrot.slane %v776, 3
        %828 = vset.pattern.permute.xlu0 13
        %829 = vperm.xlu0 %828, %v166
        %v830 = vpop.permute.xlu0 %829
        %v832 = vmul.f32 %v830, %v827
        %v833 = vadd.f32 %v826, %v832
        %834 = vset.pattern.permute.xlu0 0
        %835 = vperm.xlu0 %834, %v166
        %v836 = vpop.permute.xlu0 %835
        %v838 = vmul.f32 %v836, %v786
        %839 = vset.pattern.permute.xlu0 1
        %840 = vperm.xlu0 %839, %v166
        %v841 = vpop.permute.xlu0 %840
        %v843 = vmul.f32 %v841, %v793
        %v844 = vadd.f32 %v838, %v843
        %845 = vset.pattern.permute.xlu0 2
        %846 = vperm.xlu0 %845, %v166
        %v847 = vpop.permute.xlu0 %846
        %v849 = vmul.f32 %v847, %v800
        %v850 = vadd.f32 %v844, %v849
        %851 = vset.pattern.permute.xlu0 3
        %852 = vperm.xlu0 %851, %v166
        %v853 = vpop.permute.xlu0 %852
        %v855 = vmul.f32 %v853, %v776
        %v856 = vadd.f32 %v850, %v855
        %857 = vset.pattern.permute.xlu0 4
        %858 = vperm.xlu0 %857, %v166
        %v859 = vpop.permute.xlu0 %858
        %v861 = vmul.f32 %v859, %v813
        %v862 = vadd.f32 %v856, %v861
        %863 = vset.pattern.permute.xlu0 5
        %864 = vperm.xlu0 %863, %v166
        %v865 = vpop.permute.xlu0 %864
        %v867 = vmul.f32 %v865, %v820
        %v868 = vadd.f32 %v862, %v867
        %869 = vset.pattern.permute.xlu0 6
        %870 = vperm.xlu0 %869, %v166
        %v871 = vpop.permute.xlu0 %870
        %v873 = vmul.f32 %v871, %v827
        %v874 = vadd.f32 %v868, %v873
        %v875 = vrot.slane %v785, 5
        %876 = vset.pattern.permute.xlu0 14
        %877 = vperm.xlu0 %876, %v166
        %v878 = vpop.permute.xlu0 %877
        %v880 = vmul.f32 %v878, %v875
        %v881 = vrot.slane %v785, 6
        %882 = vset.pattern.permute.xlu0 15
        %883 = vperm.xlu0 %882, %v166
        %v884 = vpop.permute.xlu0 %883
        %v886 = vmul.f32 %v884, %v881
        %v887 = vadd.f32 %v880, %v886
        %v888 = vrot.slane %v785, 7
        %889 = vset.pattern.permute.xlu0 16
        %890 = vperm.xlu0 %889, %v166
        %v891 = vpop.permute.xlu0 %890
        %v893 = vmul.f32 %v891, %v888
        %v894 = vadd.f32 %v887, %v893
        %895 = vset.pattern.permute.xlu0 17
        %896 = vperm.xlu0 %895, %v166
        %v897 = vpop.permute.xlu0 %896
        %v899 = vmul.f32 %v897, %v785
        %v900 = vadd.f32 %v894, %v899
        %v901 = vrot.slane %v785, 1
        %902 = vset.pattern.permute.xlu0 18
        %903 = vperm.xlu0 %902, %v166
        %v904 = vpop.permute.xlu0 %903
        %v906 = vmul.f32 %v904, %v901
        %v907 = vadd.f32 %v900, %v906
        %v908 = vrot.slane %v785, 2
        %909 = vset.pattern.permute.xlu0 19
        %910 = vperm.xlu0 %909, %v166
        %v911 = vpop.permute.xlu0 %910
        %v913 = vmul.f32 %v911, %v908
        %v914 = vadd.f32 %v907, %v913
        %v915 = vrot.slane %v785, 3
        %916 = vset.pattern.permute.xlu0 20
        %917 = vperm.xlu0 %916, %v166
        %v918 = vpop.permute.xlu0 %917
        %v920 = vmul.f32 %v918, %v915
        %v921 = vadd.f32 %v914, %v920
        %v922 = vadd.f32 %v874, %v921
        %v923 = vsel %vm172, %v833, %v922
        %925 = vset.pattern.permute.xlu0 0
        %926 = vperm.xlu0 %925, %v167
        %v927 = vpop.permute.xlu0 %926
        %v929 = vadd.f32 %v923, %v927
        %930 = vrot.lane.b32.xlu0 %v929, 4
        %v931 = vpop.permute.xlu0 %930
        %v932 = vadd.s32 %v170, 4294967292
        %vm933 = vcmp.ge.s32.totalorder %v932, 0
        %vm934 = vcmp.lt.s32.totalorder %v932, 128
        %vm935 = vmand %vm933, %vm934
        %v936 = vsel %vm935, %v931, 0.0
        %v937 = vrot.slane %v936, 5
        %938 = vset.pattern.permute.xlu0 21
        %939 = vperm.xlu0 %938, %v166
        %v940 = vpop.permute.xlu0 %939
        %v942 = vmul.f32 %v940, %v937
        %v943 = vrot.slane %v936, 6
        %944 = vset.pattern.permute.xlu0 22
        %945 = vperm.xlu0 %944, %v166
        %v946 = vpop.permute.xlu0 %945
        %v948 = vmul.f32 %v946, %v943
        %v949 = vadd.f32 %v942, %v948
        %v950 = vrot.slane %v936, 7
        %951 = vset.pattern.permute.xlu0 23
        %952 = vperm.xlu0 %951, %v166
        %v953 = vpop.permute.xlu0 %952
        %v955 = vmul.f32 %v953, %v950
        %v956 = vadd.f32 %v949, %v955
        %957 = vset.pattern.permute.xlu0 24
        %958 = vperm.xlu0 %957, %v166
        %v959 = vpop.permute.xlu0 %958
        %v961 = vmul.f32 %v959, %v936
        %v962 = vadd.f32 %v956, %v961
        %v963 = vrot.slane %v936, 1
        %964 = vset.pattern.permute.xlu0 25
        %965 = vperm.xlu0 %964, %v166
        %v966 = vpop.permute.xlu0 %965
        %v968 = vmul.f32 %v966, %v963
        %v969 = vadd.f32 %v962, %v968
        %v970 = vrot.slane %v936, 2
        %971 = vset.pattern.permute.xlu0 26
        %972 = vperm.xlu0 %971, %v166
        %v973 = vpop.permute.xlu0 %972
        %v975 = vmul.f32 %v973, %v970
        %v976 = vadd.f32 %v969, %v975
        %v977 = vrot.slane %v936, 3
        %978 = vset.pattern.permute.xlu0 27
        %979 = vperm.xlu0 %978, %v166
        %v980 = vpop.permute.xlu0 %979
        %v982 = vmul.f32 %v980, %v977
        %v983 = vadd.f32 %v976, %v982
        %v984 = vrot.slane %v929, 5
        %985 = vset.pattern.permute.xlu0 28
        %986 = vperm.xlu0 %985, %v166
        %v987 = vpop.permute.xlu0 %986
        %v989 = vmul.f32 %v987, %v984
        %v990 = vrot.slane %v929, 6
        %991 = vset.pattern.permute.xlu0 29
        %992 = vperm.xlu0 %991, %v166
        %v993 = vpop.permute.xlu0 %992
        %v995 = vmul.f32 %v993, %v990
        %v996 = vadd.f32 %v989, %v995
        %v997 = vrot.slane %v929, 7
        %998 = vset.pattern.permute.xlu0 30
        %999 = vperm.xlu0 %998, %v166
        %v1000 = vpop.permute.xlu0 %999
        %v1002 = vmul.f32 %v1000, %v997
        %v1003 = vadd.f32 %v996, %v1002
        %1004 = vset.pattern.permute.xlu0 31
        %1005 = vperm.xlu0 %1004, %v166
        %v1006 = vpop.permute.xlu0 %1005
        %v1008 = vmul.f32 %v1006, %v929
        %v1009 = vadd.f32 %v1003, %v1008
        %v1010 = vrot.slane %v929, 1
        %1011 = vset.pattern.permute.xlu0 32
        %1012 = vperm.xlu0 %1011, %v166
        %v1013 = vpop.permute.xlu0 %1012
        %v1015 = vmul.f32 %v1013, %v1010
        %v1016 = vadd.f32 %v1009, %v1015
        %v1017 = vrot.slane %v929, 2
        %1018 = vset.pattern.permute.xlu0 33
        %1019 = vperm.xlu0 %1018, %v166
        %v1020 = vpop.permute.xlu0 %1019
        %v1022 = vmul.f32 %v1020, %v1017
        %v1023 = vadd.f32 %v1016, %v1022
        %v1024 = vrot.slane %v929, 3
        %1025 = vset.pattern.permute.xlu0 34
        %1026 = vperm.xlu0 %1025, %v166
        %v1027 = vpop.permute.xlu0 %1026
        %v1029 = vmul.f32 %v1027, %v1024
        %v1030 = vadd.f32 %v1023, %v1029
        %v1031 = vadd.f32 %v983, %v1030
        %1032 = vrot.lane.b32.xlu0 %v929, 124
        %v1033 = vpop.permute.xlu0 %1032
        %v1034 = vadd.s32 %v170, 4
        %vm1035 = vcmp.ge.s32.totalorder %v1034, 0
        %vm1036 = vcmp.lt.s32.totalorder %v1034, 128
        %vm1037 = vmand %vm1035, %vm1036
        %v1038 = vsel %vm1037, %v1033, 0.0
        %v1039 = vrot.slane %v1038, 5
        %1040 = vset.pattern.permute.xlu0 35
        %1041 = vperm.xlu0 %1040, %v166
        %v1042 = vpop.permute.xlu0 %1041
        %v1044 = vmul.f32 %v1042, %v1039
        %v1045 = vrot.slane %v1038, 6
        %1046 = vset.pattern.permute.xlu0 36
        %1047 = vperm.xlu0 %1046, %v166
        %v1048 = vpop.permute.xlu0 %1047
        %v1050 = vmul.f32 %v1048, %v1045
        %v1051 = vadd.f32 %v1044, %v1050
        %v1052 = vrot.slane %v1038, 7
        %1053 = vset.pattern.permute.xlu0 37
        %1054 = vperm.xlu0 %1053, %v166
        %v1055 = vpop.permute.xlu0 %1054
        %v1057 = vmul.f32 %v1055, %v1052
        %v1058 = vadd.f32 %v1051, %v1057
        %1059 = vset.pattern.permute.xlu0 38
        %1060 = vperm.xlu0 %1059, %v166
        %v1061 = vpop.permute.xlu0 %1060
        %v1063 = vmul.f32 %v1061, %v1038
        %v1064 = vadd.f32 %v1058, %v1063
        %v1065 = vrot.slane %v1038, 1
        %1066 = vset.pattern.permute.xlu0 39
        %1067 = vperm.xlu0 %1066, %v166
        %v1068 = vpop.permute.xlu0 %1067
        %v1070 = vmul.f32 %v1068, %v1065
        %v1071 = vadd.f32 %v1064, %v1070
        %v1072 = vrot.slane %v1038, 2
        %1073 = vset.pattern.permute.xlu0 40
        %1074 = vperm.xlu0 %1073, %v166
        %v1075 = vpop.permute.xlu0 %1074
        %v1077 = vmul.f32 %v1075, %v1072
        %v1078 = vadd.f32 %v1071, %v1077
        %v1079 = vrot.slane %v1038, 3
        %1080 = vset.pattern.permute.xlu0 41
        %1081 = vperm.xlu0 %1080, %v166
        %v1082 = vpop.permute.xlu0 %1081
        %v1084 = vmul.f32 %v1082, %v1079
        %v1085 = vadd.f32 %v1078, %v1084
        %v1086 = vadd.f32 %v1031, %v1085
        %1087 = vset.pattern.permute.xlu0 1
        %1088 = vperm.xlu0 %1087, %v167
        %v1089 = vpop.permute.xlu0 %1088
        %v1091 = vadd.f32 %v1086, %v1089
        %v1092 = vsub.f32 0.0, %v1091
        %v1093 = vmul.f32 %v1092, 1.442695
        %v1094 = vpow.pop %v1093
        %v1095 = vadd.f32 %v1094, 1.0
        %v1096 = vrcp.pop %v1095
        %v1097 = vmul.f32 %v1091, %v1096
        %1098 = vrot.lane.b32.xlu0 %v1097, 2
        %v1099 = vpop.permute.xlu0 %1098
        %v1100 = vadd.s32 %v170, 4294967294
        %vm1101 = vcmp.ge.s32.totalorder %v1100, 0
        %vm1102 = vcmp.lt.s32.totalorder %v1100, 128
        %vm1103 = vmand %vm1101, %vm1102
        %v1104 = vsel %vm1103, %v1099, 0.0
        %v1105 = vrot.slane %v1104, 5
        %1106 = vset.pattern.permute.xlu0 42
        %1107 = vperm.xlu0 %1106, %v166
        %v1108 = vpop.permute.xlu0 %1107
        %v1110 = vmul.f32 %v1108, %v1105
        %v1111 = vrot.slane %v1104, 6
        %1112 = vset.pattern.permute.xlu0 43
        %1113 = vperm.xlu0 %1112, %v166
        %v1114 = vpop.permute.xlu0 %1113
        %v1116 = vmul.f32 %v1114, %v1111
        %v1117 = vadd.f32 %v1110, %v1116
        %v1118 = vrot.slane %v1104, 7
        %1119 = vset.pattern.permute.xlu0 44
        %1120 = vperm.xlu0 %1119, %v166
        %v1121 = vpop.permute.xlu0 %1120
        %v1123 = vmul.f32 %v1121, %v1118
        %v1124 = vadd.f32 %v1117, %v1123
        %1125 = vset.pattern.permute.xlu0 45
        %1126 = vperm.xlu0 %1125, %v166
        %v1127 = vpop.permute.xlu0 %1126
        %v1129 = vmul.f32 %v1127, %v1104
        %v1130 = vadd.f32 %v1124, %v1129
        %v1131 = vrot.slane %v1104, 1
        %1132 = vset.pattern.permute.xlu0 46
        %1133 = vperm.xlu0 %1132, %v166
        %v1134 = vpop.permute.xlu0 %1133
        %v1136 = vmul.f32 %v1134, %v1131
        %v1137 = vadd.f32 %v1130, %v1136
        %v1138 = vrot.slane %v1104, 2
        %1139 = vset.pattern.permute.xlu0 47
        %1140 = vperm.xlu0 %1139, %v166
        %v1141 = vpop.permute.xlu0 %1140
        %v1143 = vmul.f32 %v1141, %v1138
        %v1144 = vadd.f32 %v1137, %v1143
        %v1145 = vrot.slane %v1104, 3
        %1146 = vset.pattern.permute.xlu0 48
        %1147 = vperm.xlu0 %1146, %v166
        %v1148 = vpop.permute.xlu0 %1147
        %v1150 = vmul.f32 %v1148, %v1145
        %v1151 = vadd.f32 %v1144, %v1150
        %v1152 = vrot.slane %v1097, 5
        %1153 = vset.pattern.permute.xlu0 49
        %1154 = vperm.xlu0 %1153, %v166
        %v1155 = vpop.permute.xlu0 %1154
        %v1157 = vmul.f32 %v1155, %v1152
        %v1158 = vrot.slane %v1097, 6
        %1159 = vset.pattern.permute.xlu0 50
        %1160 = vperm.xlu0 %1159, %v166
        %v1161 = vpop.permute.xlu0 %1160
        %v1163 = vmul.f32 %v1161, %v1158
        %v1164 = vadd.f32 %v1157, %v1163
        %v1165 = vrot.slane %v1097, 7
        %1166 = vset.pattern.permute.xlu0 51
        %1167 = vperm.xlu0 %1166, %v166
        %v1168 = vpop.permute.xlu0 %1167
        %v1170 = vmul.f32 %v1168, %v1165
        %v1171 = vadd.f32 %v1164, %v1170
        %1172 = vset.pattern.permute.xlu0 52
        %1173 = vperm.xlu0 %1172, %v166
        %v1174 = vpop.permute.xlu0 %1173
        %v1176 = vmul.f32 %v1174, %v1097
        %v1177 = vadd.f32 %v1171, %v1176
        %v1178 = vrot.slane %v1097, 1
        %1179 = vset.pattern.permute.xlu0 53
        %1180 = vperm.xlu0 %1179, %v166
        %v1181 = vpop.permute.xlu0 %1180
        %v1183 = vmul.f32 %v1181, %v1178
        %v1184 = vadd.f32 %v1177, %v1183
        %v1185 = vrot.slane %v1097, 2
        %1186 = vset.pattern.permute.xlu0 54
        %1187 = vperm.xlu0 %1186, %v166
        %v1188 = vpop.permute.xlu0 %1187
        %v1190 = vmul.f32 %v1188, %v1185
        %v1191 = vadd.f32 %v1184, %v1190
        %v1192 = vrot.slane %v1097, 3
        %1193 = vset.pattern.permute.xlu0 55
        %1194 = vperm.xlu0 %1193, %v166
        %v1195 = vpop.permute.xlu0 %1194
        %v1197 = vmul.f32 %v1195, %v1192
        %v1198 = vadd.f32 %v1191, %v1197
        %v1199 = vadd.f32 %v1151, %v1198
        %1200 = vrot.lane.b32.xlu0 %v1097, 126
        %v1201 = vpop.permute.xlu0 %1200
        %v1202 = vsel %vm784, %v1201, 0.0
        %v1203 = vrot.slane %v1202, 5
        %1204 = vset.pattern.permute.xlu0 56
        %1205 = vperm.xlu0 %1204, %v166
        %v1206 = vpop.permute.xlu0 %1205
        %v1208 = vmul.f32 %v1206, %v1203
        %v1209 = vrot.slane %v1202, 6
        %1210 = vset.pattern.permute.xlu0 57
        %1211 = vperm.xlu0 %1210, %v166
        %v1212 = vpop.permute.xlu0 %1211
        %v1214 = vmul.f32 %v1212, %v1209
        %v1215 = vadd.f32 %v1208, %v1214
        %v1216 = vrot.slane %v1202, 7
        %1217 = vset.pattern.permute.xlu0 58
        %1218 = vperm.xlu0 %1217, %v166
        %v1219 = vpop.permute.xlu0 %1218
        %v1221 = vmul.f32 %v1219, %v1216
        %v1222 = vadd.f32 %v1215, %v1221
        %1223 = vset.pattern.permute.xlu0 59
        %1224 = vperm.xlu0 %1223, %v166
        %v1225 = vpop.permute.xlu0 %1224
        %v1227 = vmul.f32 %v1225, %v1202
        %v1228 = vadd.f32 %v1222, %v1227
        %v1229 = vrot.slane %v1202, 1
        %1230 = vset.pattern.permute.xlu0 60
        %1231 = vperm.xlu0 %1230, %v166
        %v1232 = vpop.permute.xlu0 %1231
        %v1234 = vmul.f32 %v1232, %v1229
        %v1235 = vadd.f32 %v1228, %v1234
        %v1236 = vrot.slane %v1202, 2
        %1237 = vset.pattern.permute.xlu0 61
        %1238 = vperm.xlu0 %1237, %v166
        %v1239 = vpop.permute.xlu0 %1238
        %v1241 = vmul.f32 %v1239, %v1236
        %v1242 = vadd.f32 %v1235, %v1241
        %v1243 = vrot.slane %v1202, 3
        %1244 = vset.pattern.permute.xlu0 62
        %1245 = vperm.xlu0 %1244, %v166
        %v1246 = vpop.permute.xlu0 %1245
        %v1248 = vmul.f32 %v1246, %v1243
        %v1249 = vadd.f32 %v1242, %v1248
        %v1250 = vadd.f32 %v1199, %v1249
        %1251 = vset.pattern.permute.xlu0 2
        %1252 = vperm.xlu0 %1251, %v167
        %v1253 = vpop.permute.xlu0 %1252
        %v1255 = vadd.f32 %v1250, %v1253
        %v1256 = vsub.f32 0.0, %v1255
        %v1257 = vmul.f32 %v1256, 1.442695
        %v1258 = vpow.pop %v1257
        %v1259 = vadd.f32 %v1258, 1.0
        %v1260 = vrcp.pop %v1259
        %v1261 = vmul.f32 %v1255, %v1260
        %1262 = vrot.lane.b32.xlu0 %v1261, 1
        %v1263 = vpop.permute.xlu0 %1262
        %v1264 = vadd.s32 %v170, 4294967295
        %vm1265 = vcmp.ge.s32.totalorder %v1264, 0
        %vm1266 = vcmp.lt.s32.totalorder %v1264, 128
        %vm1267 = vmand %vm1265, %vm1266
        %v1268 = vsel %vm1267, %v1263, 0.0
        %v1269 = vrot.slane %v1268, 5
        %1270 = vset.pattern.permute.xlu0 63
        %1271 = vperm.xlu0 %1270, %v166
        %v1272 = vpop.permute.xlu0 %1271
        %v1274 = vmul.f32 %v1272, %v1269
        %v1275 = vrot.slane %v1268, 6
        %1276 = vset.pattern.permute.xlu0 64
        %1277 = vperm.xlu0 %1276, %v166
        %v1278 = vpop.permute.xlu0 %1277
        %v1280 = vmul.f32 %v1278, %v1275
        %v1281 = vadd.f32 %v1274, %v1280
        %v1282 = vrot.slane %v1268, 7
        %1283 = vset.pattern.permute.xlu0 65
        %1284 = vperm.xlu0 %1283, %v166
        %v1285 = vpop.permute.xlu0 %1284
        %v1287 = vmul.f32 %v1285, %v1282
        %v1288 = vadd.f32 %v1281, %v1287
        %1289 = vset.pattern.permute.xlu0 66
        %1290 = vperm.xlu0 %1289, %v166
        %v1291 = vpop.permute.xlu0 %1290
        %v1293 = vmul.f32 %v1291, %v1268
        %v1294 = vadd.f32 %v1288, %v1293
        %v1295 = vrot.slane %v1268, 1
        %1296 = vset.pattern.permute.xlu0 67
        %1297 = vperm.xlu0 %1296, %v166
        %v1298 = vpop.permute.xlu0 %1297
        %v1300 = vmul.f32 %v1298, %v1295
        %v1301 = vadd.f32 %v1294, %v1300
        %v1302 = vrot.slane %v1268, 2
        %1303 = vset.pattern.permute.xlu0 68
        %1304 = vperm.xlu0 %1303, %v166
        %v1305 = vpop.permute.xlu0 %1304
        %v1307 = vmul.f32 %v1305, %v1302
        %v1308 = vadd.f32 %v1301, %v1307
        %v1309 = vrot.slane %v1268, 3
        %1310 = vset.pattern.permute.xlu0 69
        %1311 = vperm.xlu0 %1310, %v166
        %v1312 = vpop.permute.xlu0 %1311
        %v1314 = vmul.f32 %v1312, %v1309
        %v1315 = vadd.f32 %v1308, %v1314
        %v1316 = vrot.slane %v1261, 5
        %1317 = vset.pattern.permute.xlu0 70
        %1318 = vperm.xlu0 %1317, %v166
        %v1319 = vpop.permute.xlu0 %1318
        %v1321 = vmul.f32 %v1319, %v1316
        %v1322 = vrot.slane %v1261, 6
        %1323 = vset.pattern.permute.xlu0 71
        %1324 = vperm.xlu0 %1323, %v166
        %v1325 = vpop.permute.xlu0 %1324
        %v1327 = vmul.f32 %v1325, %v1322
        %v1328 = vadd.f32 %v1321, %v1327
        %v1329 = vrot.slane %v1261, 7
        %1330 = vset.pattern.permute.xlu0 72
        %1331 = vperm.xlu0 %1330, %v166
        %v1332 = vpop.permute.xlu0 %1331
        %v1334 = vmul.f32 %v1332, %v1329
        %v1335 = vadd.f32 %v1328, %v1334
        %1336 = vset.pattern.permute.xlu0 73
        %1337 = vperm.xlu0 %1336, %v166
        %v1338 = vpop.permute.xlu0 %1337
        %v1340 = vmul.f32 %v1338, %v1261
        %v1341 = vadd.f32 %v1335, %v1340
        %v1342 = vrot.slane %v1261, 1
        %1343 = vset.pattern.permute.xlu0 74
        %1344 = vperm.xlu0 %1343, %v166
        %v1345 = vpop.permute.xlu0 %1344
        %v1347 = vmul.f32 %v1345, %v1342
        %v1348 = vadd.f32 %v1341, %v1347
        %v1349 = vrot.slane %v1261, 2
        %1350 = vset.pattern.permute.xlu0 75
        %1351 = vperm.xlu0 %1350, %v166
        %v1352 = vpop.permute.xlu0 %1351
        %v1354 = vmul.f32 %v1352, %v1349
        %v1355 = vadd.f32 %v1348, %v1354
        %v1356 = vrot.slane %v1261, 3
        %1357 = vset.pattern.permute.xlu0 76
        %1358 = vperm.xlu0 %1357, %v166
        %v1359 = vpop.permute.xlu0 %1358
        %v1361 = vmul.f32 %v1359, %v1356
        %v1362 = vadd.f32 %v1355, %v1361
        %v1363 = vadd.f32 %v1315, %v1362
        %1364 = vrot.lane.b32.xlu0 %v1261, 127
        %v1365 = vpop.permute.xlu0 %1364
        %v1366 = vadd.s32 %v170, 1
        %vm1367 = vcmp.ge.s32.totalorder %v1366, 0
        %vm1368 = vcmp.lt.s32.totalorder %v1366, 128
        %vm1369 = vmand %vm1367, %vm1368
        %v1370 = vsel %vm1369, %v1365, 0.0
        %v1371 = vrot.slane %v1370, 5
        %1372 = vset.pattern.permute.xlu0 77
        %1373 = vperm.xlu0 %1372, %v166
        %v1374 = vpop.permute.xlu0 %1373
        %v1376 = vmul.f32 %v1374, %v1371
        %v1377 = vrot.slane %v1370, 6
        %1378 = vset.pattern.permute.xlu0 78
        %1379 = vperm.xlu0 %1378, %v166
        %v1380 = vpop.permute.xlu0 %1379
        %v1382 = vmul.f32 %v1380, %v1377
        %v1383 = vadd.f32 %v1376, %v1382
        %v1384 = vrot.slane %v1370, 7
        %1385 = vset.pattern.permute.xlu0 79
        %1386 = vperm.xlu0 %1385, %v166
        %v1387 = vpop.permute.xlu0 %1386
        %v1389 = vmul.f32 %v1387, %v1384
        %v1390 = vadd.f32 %v1383, %v1389
        %1391 = vset.pattern.permute.xlu0 80
        %1392 = vperm.xlu0 %1391, %v166
        %v1393 = vpop.permute.xlu0 %1392
        %v1395 = vmul.f32 %v1393, %v1370
        %v1396 = vadd.f32 %v1390, %v1395
        %v1397 = vrot.slane %v1370, 1
        %1398 = vset.pattern.permute.xlu0 81
        %1399 = vperm.xlu0 %1398, %v166
        %v1400 = vpop.permute.xlu0 %1399
        %v1402 = vmul.f32 %v1400, %v1397
        %v1403 = vadd.f32 %v1396, %v1402
        %v1404 = vrot.slane %v1370, 2
        %1405 = vset.pattern.permute.xlu0 82
        %1406 = vperm.xlu0 %1405, %v166
        %v1407 = vpop.permute.xlu0 %1406
        %v1409 = vmul.f32 %v1407, %v1404
        %v1410 = vadd.f32 %v1403, %v1409
        %v1411 = vrot.slane %v1370, 3
        %1412 = vset.pattern.permute.xlu0 83
        %1413 = vperm.xlu0 %1412, %v166
        %v1414 = vpop.permute.xlu0 %1413
        %v1416 = vmul.f32 %v1414, %v1411
        %v1417 = vadd.f32 %v1410, %v1416
        %v1418 = vadd.f32 %v1363, %v1417
        %1419 = vset.pattern.permute.xlu0 3
        %1420 = vperm.xlu0 %1419, %v167
        %v1421 = vpop.permute.xlu0 %1420
        %v1423 = vadd.f32 %v1418, %v1421
        %v1424 = vsub.f32 0.0, %v1423
        %v1425 = vmul.f32 %v1424, 1.442695
        %v1426 = vpow.pop %v1425
        %v1427 = vadd.f32 %v1426, 1.0
        %v1428 = vrcp.pop %v1427
        %v1429 = vmul.f32 %v1423, %v1428
        %v1430 = vadd.f32 %v1429, %v929
        %1431 = vst [vmem:[%s161] sm:$0xff] %v1430
        %s1432 = sand.u32 %s93, 1
        %s1433 = scalar_lea.sflag [#allocation3], %s1432
        %s1434 = sand.u32 %s93, 1
        %s1435 = smul.addr %s1434, 8
        %s1436 = scalar_lea.vmem [#allocation2], %s1435
        // Predicated region
        $region33: #{transposed_conv_block.1} parent=31 // pred_check
          %p1437 = pneg %p103
        $region34: #{transposed_conv_block.1} parent=31 // pred_check_branch
          %1439 = sbr.rel (%p1437) target = $region36
        $region35: #{transposed_conv_block.1} parent=31 // pred_region
          %s1441 = ssub.s32 128, 128
          %1442 = vsyncadd %s1433, %s1441
          %s1443 = smul.addr %s17, 128
          %s1444 = scalar_lea.hbm %s3, %s1443
          %s1446 = sshll.u32 %s1436, 4
          %s1447 = int_to_ptr.vmem [resolvable:$true] %s1446
          %1449 = dma.vmem_to_hbm [thread:$0]  %s1447, 128, %s1444, %s1433
        $region36: #{transposed_conv_block.1} parent=31 // pred_fallthru
          _
      $region32: #{transposed_conv_block.1} parent=5 // pred_fallthru
        _
      %p1450 = scmp.le.s32.totalorder 2, %s12
      // Predicated region
      $region37: #{transposed_conv_block.1} parent=5 // pred_check
        %p1451 = pneg %p1450
      $region38: #{transposed_conv_block.1} parent=5 // pred_check_branch
        %1453 = sbr.rel (%p1451) target = $region40
      $region39: #{transposed_conv_block.1} parent=5 // pred_region
        %s1454 = ssub.s32 %s12, 2
        // Predicated region
        $region41: #{transposed_conv_block.1} parent=39 // pred_check
          %p1455 = pneg %p109
        $region42: #{transposed_conv_block.1} parent=39 // pred_check_branch
          %1457 = sbr.rel (%p1455) target = $region44
        $region43: #{transposed_conv_block.1} parent=39 // pred_region
          %s1458 = sand.u32 %s94, 1
          %s1459 = scalar_lea.sflag [#allocation3], %s1458
          %s1460 = sand.u32 %s94, 1
          %s1461 = smul.addr %s1460, 8
          %s1462 = scalar_lea.vmem [#allocation2], %s1461
          %1463 = dma.done %s1459, 128
        $region44: #{transposed_conv_block.1} parent=39 // pred_fallthru
          _
      $region40: #{transposed_conv_block.1} parent=5 // pred_fallthru
        _
    $region6: #{transposed_conv_block.1} parent=1 // loop_footer
      %s16 = sadd.s32 1, %s12
    $region7: #{transposed_conv_block.1} parent=1 // loop_footer_branch
      %11 = sbr.rel target = $region3
    $region8: #{transposed_conv_block.1} parent=1 // loop_exit
      _
    %1464 = vsyncpa [#allocation3], 1
    %s1465 = scalar_lea.sflag [#allocation3], 1
    %1466 = vsyncpa %s1465, 1

</llo_original>
